<compile_context>
chip_gen: v7x
topology: tpu7x:2x2x1
jax: 0.10.0
libtpu: 0.0.40
codegen_flags: <defaults>
</compile_context>

<pallas_src>
import functools

import jax
import jax.numpy as jnp
import numpy as np
from jax.experimental import pallas as pl
from jax.experimental.pallas import tpu as pltpu


def _round_up(x, m):
    return (x + m - 1) // m * m


def _make_mlp_kernel(num_hidden_layers):
    """Fused MLP kernel.

    Ref order: x, [w_i, b_i] * num_hidden_layers, w_out_row, b_out, out.
    Hidden-layer matmuls run on the MXU with M = TILE_B; bias + ReLU on the VPU;
    the 1-wide output head is a VPU multiply + XLU row reduction.
    """

    def kernel(x_ref, *rest):
        out_ref = rest[-1]
        prm = rest[:-1]

        h = x_ref[...]  # (TILE_B, d_in) f32
        for l in range(num_hidden_layers):
            w = prm[2 * l][...]          # (d_in, d_out), BN scale folded in
            b = prm[2 * l + 1][...]      # (1, d_out),   BN shift folded in
            h = jnp.dot(h, w, preferred_element_type=jnp.float32) + b
            h = jnp.maximum(h, 0.0)      # ReLU (Dropout = identity in eval)

        w_out = prm[2 * num_hidden_layers][...]       # (1, d_last)
        b_out = prm[2 * num_hidden_layers + 1][...]   # (1, 1)
        y = jnp.sum(h * w_out, axis=-1, keepdims=True) + b_out
        out_ref[...] = y.astype(out_ref.dtype)

    return kernel


def prepare_params(params, output_params, eps=1e-5):
    """One-time (model-load) folding of Linear + BatchNorm1d(eval) into (W', b')."""
    ops = []
    for p in params:
        inv_std = 1.0 / jnp.sqrt(p["running_var"] + eps)
        scale = p["gamma"] * inv_std                                     # (out,)
        w_fold = p["weight"].T * scale[None, :]                          # (in, out)
        b_fold = (p["bias"] - p["running_mean"]) * scale + p["beta"]     # (out,)
        ops.append(jnp.asarray(w_fold, jnp.float32))
        ops.append(jnp.asarray(b_fold, jnp.float32)[None, :])
    ops.append(jnp.asarray(output_params["weight"], jnp.float32))        # (1, d_last)
    ops.append(jnp.asarray(output_params["bias"], jnp.float32)[None, :]) # (1, 1)
    return tuple(ops)


def mlp_forward(x, prepared, *, tile_b=512, vmem_limit_bytes=32 * 1024 * 1024):
    """x: (batch, input_dim) f32. prepared: output of prepare_params()."""
    batch, d_in = x.shape
    num_hidden = (len(prepared) - 2) // 2

    # Tile the batch; multiple of 128 (v5e MXU) and, at >=256/512, of 256 (v6e/v7x).
    tb = min(tile_b, _round_up(batch, 128))
    padded = _round_up(batch, tb)
    if padded != batch:
        x = jnp.pad(x, ((0, padded - batch), (0, 0)))

    const_map = lambda i: (0, 0)
    in_specs = [pl.BlockSpec((tb, d_in), lambda i: (i, 0))]
    for arr in prepared:
        in_specs.append(pl.BlockSpec(arr.shape, const_map))

    out = pl.pallas_call(
        _make_mlp_kernel(num_hidden),
        out_shape=jax.ShapeDtypeStruct((padded, 1), jnp.float32),
        grid_spec=pltpu.PrefetchScalarGridSpec(
            num_scalar_prefetch=0,
            grid=(padded // tb,),
            in_specs=in_specs,
            out_specs=pl.BlockSpec((tb, 1), lambda i: (i, 0)),
        ),
        compiler_params=pltpu.CompilerParams(
            dimension_semantics=("parallel",),
            vmem_limit_bytes=vmem_limit_bytes,
        ),
    )(x, *prepared)
    return out[:batch]


def _reference(x, params, output_params, eps=1e-5):
    h = x
    for p in params:
        z = h @ p["weight"].T + p["bias"]
        z = (z - p["running_mean"]) / jnp.sqrt(p["running_var"] + eps)
        z = z * p["gamma"] + p["beta"]
        h = jnp.maximum(z, 0.0)
    return h @ output_params["weight"].T + output_params["bias"]


if __name__ == "__main__":
    key = jax.random.PRNGKey(0)

    batch = 1000                 # padded to 1024 inside the wrapper -> 2 grid steps of 512
    input_dim = 16
    embedding_dims = (32, 16)
    dropout = 0.2                # identity in eval mode

    # Deterministic synthetic parameters (no checkpoint load).
    params = []
    in_dim = input_dim
    for emb_dim in embedding_dims:
        key, kw, kb, kg, kbe, km, kv = jax.random.split(key, 7)
        params.append({
            "weight": jax.random.normal(kw, (emb_dim, in_dim), jnp.float32) * 0.1,
            "bias": jax.random.normal(kb, (emb_dim,), jnp.float32) * 0.1,
            "gamma": 1.0 + 0.1 * jax.random.normal(kg, (emb_dim,), jnp.float32),
            "beta": 0.1 * jax.random.normal(kbe, (emb_dim,), jnp.float32),
            "running_mean": 0.1 * jax.random.normal(km, (emb_dim,), jnp.float32),
            "running_var": jnp.abs(1.0 + 0.1 * jax.random.normal(kv, (emb_dim,), jnp.float32)),
        })
        in_dim = emb_dim

    key, kw, kb = jax.random.split(key, 3)
    output_params = {
        "weight": jax.random.normal(kw, (1, in_dim), jnp.float32) * 0.1,
        "bias": jax.random.normal(kb, (1,), jnp.float32) * 0.1,
    }

    key, kx = jax.random.split(key)
    x = jax.random.normal(kx, (batch, input_dim), jnp.float32)

    prepared = prepare_params(params, output_params)   # one-time, at "model load"
    fwd = jax.jit(mlp_forward)
    out = jax.block_until_ready(fwd(x, prepared))

    ref = _reference(x, params, output_params)
    assert out.shape == (batch, 1), out.shape
    np.testing.assert_allclose(np.asarray(out), np.asarray(ref), rtol=1e-5, atol=1e-5)

    print("KERNEL_OK")
</pallas_src>

<mosaic_0001>
module attributes {stable_mosaic.version = 11 : i64} {
  func.func @kernel(%arg0: i32, %arg1: memref<512x16xf32, #tpu.memory_space<vmem>>, %arg2: memref<16x32xf32, #tpu.memory_space<vmem>>, %arg3: memref<1x32xf32, #tpu.memory_space<vmem>>, %arg4: memref<32x16xf32, #tpu.memory_space<vmem>>, %arg5: memref<1x16xf32, #tpu.memory_space<vmem>>, %arg6: memref<1x16xf32, #tpu.memory_space<vmem>>, %arg7: memref<1x1xf32, #tpu.memory_space<vmem>>, %arg8: memref<512x1xf32, #tpu.memory_space<vmem>>) attributes {dimension_semantics = [#tpu.dimension_semantics<parallel>], iteration_bounds = array<i64: 2>, scalar_prefetch = 0 : i64, scratch_operands = 0 : i64, tpu.core_type = #tpu.core_type<tc>, window_params = [{transform_indices = @transform_0, window_bounds = array<i64: 512, 16>}, {pipeline_mode = #tpu.pipeline_mode<synchronous>, transform_indices = @transform_1, window_bounds = array<i64: 16, 32>}, {pipeline_mode = #tpu.pipeline_mode<synchronous>, transform_indices = @transform_2, window_bounds = array<i64: 1, 32>}, {pipeline_mode = #tpu.pipeline_mode<synchronous>, transform_indices = @transform_3, window_bounds = array<i64: 32, 16>}, {pipeline_mode = #tpu.pipeline_mode<synchronous>, transform_indices = @transform_4, window_bounds = array<i64: 1, 16>}, {pipeline_mode = #tpu.pipeline_mode<synchronous>, transform_indices = @transform_5, window_bounds = array<i64: 1, 16>}, {pipeline_mode = #tpu.pipeline_mode<synchronous>, transform_indices = @transform_6, window_bounds = array<i64: 1, 1>}, {transform_indices = @transform_7, window_bounds = array<i64: 512, 1>}]} {
    %c0 = arith.constant 0 : index
    %c0_0 = arith.constant 0 : index
    %0 = vector.load %arg1[%c0, %c0_0] : memref<512x16xf32, #tpu.memory_space<vmem>>, vector<512x16xf32>
    %c0_1 = arith.constant 0 : index
    %c0_2 = arith.constant 0 : index
    %1 = vector.load %arg2[%c0_1, %c0_2] : memref<16x32xf32, #tpu.memory_space<vmem>>, vector<16x32xf32>
    %c0_3 = arith.constant 0 : index
    %c0_4 = arith.constant 0 : index
    %2 = vector.load %arg3[%c0_3, %c0_4] : memref<1x32xf32, #tpu.memory_space<vmem>>, vector<1x32xf32>
    %cst = arith.constant dense<0.000000e+00> : vector<512x32xf32>
    %3 = tpu.matmul %0, %1, %cst {dimension_numbers = #tpu.dot_dimension_numbers<[1], [0], [0], [1], [0, 0, 1, 1], [], []>} : vector<512x16xf32>, vector<16x32xf32>, vector<512x32xf32> -> vector<512x32xf32>
    %4 = vector.broadcast %2 : vector<1x32xf32> to vector<512x32xf32>
    %5 = arith.addf %3, %4 : vector<512x32xf32>
    %cst_5 = arith.constant 0.000000e+00 : f32
    %6 = vector.broadcast %cst_5 : f32 to vector<512x32xf32>
    %7 = arith.maximumf %5, %6 : vector<512x32xf32>
    %c0_6 = arith.constant 0 : index
    %c0_7 = arith.constant 0 : index
    %8 = vector.load %arg4[%c0_6, %c0_7] : memref<32x16xf32, #tpu.memory_space<vmem>>, vector<32x16xf32>
    %c0_8 = arith.constant 0 : index
    %c0_9 = arith.constant 0 : index
    %9 = vector.load %arg5[%c0_8, %c0_9] : memref<1x16xf32, #tpu.memory_space<vmem>>, vector<1x16xf32>
    %cst_10 = arith.constant dense<0.000000e+00> : vector<512x16xf32>
    %10 = tpu.matmul %7, %8, %cst_10 {dimension_numbers = #tpu.dot_dimension_numbers<[1], [0], [0], [1], [0, 0, 1, 1], [], []>} : vector<512x32xf32>, vector<32x16xf32>, vector<512x16xf32> -> vector<512x16xf32>
    %11 = vector.broadcast %9 : vector<1x16xf32> to vector<512x16xf32>
    %12 = arith.addf %10, %11 : vector<512x16xf32>
    %cst_11 = arith.constant 0.000000e+00 : f32
    %13 = vector.broadcast %cst_11 : f32 to vector<512x16xf32>
    %14 = arith.maximumf %12, %13 : vector<512x16xf32>
    %c0_12 = arith.constant 0 : index
    %c0_13 = arith.constant 0 : index
    %15 = vector.load %arg6[%c0_12, %c0_13] : memref<1x16xf32, #tpu.memory_space<vmem>>, vector<1x16xf32>
    %c0_14 = arith.constant 0 : index
    %c0_15 = arith.constant 0 : index
    %16 = vector.load %arg7[%c0_14, %c0_15] : memref<1x1xf32, #tpu.memory_space<vmem>>, vector<1x1xf32>
    %17 = vector.broadcast %15 : vector<1x16xf32> to vector<512x16xf32>
    %18 = arith.mulf %14, %17 : vector<512x16xf32>
    %cst_16 = arith.constant dense<0.000000e+00> : vector<512xf32>
    %19 = vector.multi_reduction <add>, %18, %cst_16 [1] : vector<512x16xf32> to vector<512xf32>
    %20 = vector.shape_cast %19 : vector<512xf32> to vector<512x1xf32>
    %21 = vector.broadcast %16 : vector<1x1xf32> to vector<512x1xf32>
    %22 = arith.addf %20, %21 : vector<512x1xf32>
    %c0_17 = arith.constant 0 : index
    %c0_18 = arith.constant 0 : index
    %23 = vector.load %arg8[%c0_17, %c0_18] : memref<512x1xf32, #tpu.memory_space<vmem>>, vector<512x1xf32>
    tpu.vector_store %arg8[%c0_17, %c0_18], %22 {strides = array<i32>} : memref<512x1xf32, #tpu.memory_space<vmem>>, vector<512x1xf32>,
    return
  }
  func.func @transform_0(%arg0: i32) -> (i32, i32) {
    %c0_i32 = arith.constant 0 : i32
    %c0_i32_0 = arith.constant 0 : i32
    return %arg0, %c0_i32 : i32, i32
  }
  func.func @transform_1(%arg0: i32) -> (i32, i32) {
    %c0_i32 = arith.constant 0 : i32
    %c0_i32_0 = arith.constant 0 : i32
    %c0_i32_1 = arith.constant 0 : i32
    return %c0_i32, %c0_i32_0 : i32, i32
  }
  func.func @transform_2(%arg0: i32) -> (i32, i32) {
    %c0_i32 = arith.constant 0 : i32
    %c0_i32_0 = arith.constant 0 : i32
    %c0_i32_1 = arith.constant 0 : i32
    return %c0_i32, %c0_i32_0 : i32, i32
  }
  func.func @transform_3(%arg0: i32) -> (i32, i32) {
    %c0_i32 = arith.constant 0 : i32
    %c0_i32_0 = arith.constant 0 : i32
    %c0_i32_1 = arith.constant 0 : i32
    return %c0_i32, %c0_i32_0 : i32, i32
  }
  func.func @transform_4(%arg0: i32) -> (i32, i32) {
    %c0_i32 = arith.constant 0 : i32
    %c0_i32_0 = arith.constant 0 : i32
    %c0_i32_1 = arith.constant 0 : i32
    return %c0_i32, %c0_i32_0 : i32, i32
  }
  func.func @transform_5(%arg0: i32) -> (i32, i32) {
    %c0_i32 = arith.constant 0 : i32
    %c0_i32_0 = arith.constant 0 : i32
    %c0_i32_1 = arith.constant 0 : i32
    return %c0_i32, %c0_i32_0 : i32, i32
  }
  func.func @transform_6(%arg0: i32) -> (i32, i32) {
    %c0_i32 = arith.constant 0 : i32
    %c0_i32_0 = arith.constant 0 : i32
    %c0_i32_1 = arith.constant 0 : i32
    return %c0_i32, %c0_i32_0 : i32, i32
  }
  func.func @transform_7(%arg0: i32) -> (i32, i32) {
    %c0_i32 = arith.constant 0 : i32
    %c0_i32_0 = arith.constant 0 : i32
    return %arg0, %c0_i32 : i32, i32
  }
}

</mosaic_0001>

<llo_original>
// kernel: mlp_forward.1
$region0: #{mlp_forward.1}
  #allocation0 [shape = 'u32[]', space=smem, size = 0x4, offset = 0x4, fixed_abs, tag = 'smem constant byte address 0x4 - core index']
  #allocation1 [shape = 'u32[144,128]{1,0:T(1,128)}', space=vmem, size = 0x12000, scoped, tag = 'internal scratch']
  #allocation2 [shape = 'f32[1,1]{1,0:T(1,128)S(1)}', space=vmem, size = 0x200, scoped, tag = 'scoped memory for mlp_forward.1']
  %s0 = inlined_call_operand.vmem [shape: f32[1024,16], index: 0, kind: input, shape index: {}]
  %s1 = inlined_call_operand.vmem [shape: f32[16,32], index: 1, kind: input, shape index: {}]
  %s2 = inlined_call_operand.vmem [shape: f32[1,32], index: 2, kind: input, shape index: {}]
  %s3 = inlined_call_operand.vmem [shape: f32[32,16], index: 3, kind: input, shape index: {}]
  %s4 = inlined_call_operand.vmem [shape: f32[1,16], index: 4, kind: input, shape index: {}]
  %s5 = inlined_call_operand.vmem [shape: f32[1,16], index: 5, kind: input, shape index: {}]
  %s6 = inlined_call_operand.<no memory space> [shape: f32[1,1], index: 6, kind: input, shape index: {}]
  %s7 = inlined_call_operand.vmem [shape: f32[1024,1], index: 7, kind: output, shape index: {}]
  %s8 = sld [smem:[#allocation0]]
  $region61: #{mlp_forward.1} parent=0
    _
  %s10 = ssub.s32 1, %s8
  %s11 = scalar_select 0, %s10, %s8
  %v12 = vstv %s6
  %13 = vst [vmem:[#allocation2] sm:$0x1] %v12
  loop: start=0, step=1, limit=4
  $region2: #{mlp_forward.1} parent=0 // loop_pre_header
    _
  $region3: #{mlp_forward.1} parent=0 // loop_header
    %s15 = sphi 0, %s19
    %p16 = scmp.ge.s32.totalorder %s15, 4
    %s25 = sphi 0, %s27
    %s28 = sphi 0, %s25
    %s29 = sphi 0, %s28
    %s45 = sphi 0, %s29
    %s49 = sphi 0, %s49
    %s51 = sphi 0, %s49
    %s52 = sphi 0, %s51
    %s66 = sphi 0, %s52
    %s70 = sphi 0, %s70
    %s72 = sphi 0, %s70
    %s73 = sphi 0, %s72
    %s87 = sphi 0, %s73
    %s91 = sphi 0, %s91
    %s93 = sphi 0, %s91
    %s94 = sphi 0, %s93
    %s108 = sphi 0, %s94
    %s112 = sphi 0, %s112
    %s114 = sphi 0, %s112
    %s115 = sphi 0, %s114
    %s129 = sphi 0, %s115
    %s133 = sphi 0, %s133
    %s135 = sphi 0, %s133
    %s136 = sphi 0, %s135
    %s150 = sphi 0, %s136
    %s154 = sphi 0, %s154
    %s156 = sphi 0, %s154
    %s157 = sphi 0, %s156
    %s171 = sphi 0, %s157
    %s177 = sphi 0, %s179
    %s180 = sphi 0, %s177
    %s181 = sphi 0, %s180
    %s197 = sphi 0, %s181
  $region4: #{mlp_forward.1} parent=0 // loop_header_branch
    %18 = sbr.rel (%p16) target = $region8
  $region5: #{mlp_forward.1} parent=0 // loop_body
    %s20 = ssub.s32 %s15, 1
    %s21 = ssub.s32 %s15, 2
    %s22 = sadd.s32 %s15, 1
    %s23 = ssub.s32 %s15, %s22
    %p24 = scmp.eq.s32.totalorder %s23, 0
    %s26 = sadd.s32 %s25, 1
    %s27 = scalar_select %p24, %s25, %s26
    %p30 = pneg %p24
    %p31 = scmp.eq.s32.totalorder %s15, 1
    %p32 = por %p30, %p31
    %p33 = scmp.ne.s32.totalorder %s25, %s28
    %p34 = scmp.eq.s32.totalorder %s15, 0
    %p35 = por %p33, %p34
    %p36 = scmp.ne.s32.totalorder %s25, %s28
    %p37 = scmp.eq.s32.totalorder %s20, 1
    %p38 = por %p36, %p37
    %p39 = scmp.ne.s32.totalorder %s28, %s29
    %p40 = scmp.eq.s32.totalorder %s20, 0
    %p41 = por %p39, %p40
    %p42 = scmp.ne.s32.totalorder %s28, %s29
    %p43 = scmp.eq.s32.totalorder %s21, 1
    %p44 = por %p42, %p43
    %p46 = scmp.ne.s32.totalorder %s29, %s45
    %p47 = scmp.eq.s32.totalorder %s21, 0
    %p48 = por %p46, %p47
    %s50 = sadd.s32 %s49, 1
    %p53 = scmp.eq.s32.totalorder %s15, 1
    %p54 = scmp.ne.s32.totalorder %s49, %s51
    %p55 = scmp.eq.s32.totalorder %s15, 0
    %p56 = por %p54, %p55
    %p57 = scmp.ne.s32.totalorder %s49, %s51
    %p58 = scmp.eq.s32.totalorder %s20, 1
    %p59 = por %p57, %p58
    %p60 = scmp.ne.s32.totalorder %s51, %s52
    %p61 = scmp.eq.s32.totalorder %s20, 0
    %p62 = por %p60, %p61
    %p63 = scmp.ne.s32.totalorder %s51, %s52
    %p64 = scmp.eq.s32.totalorder %s21, 1
    %p65 = por %p63, %p64
    %p67 = scmp.ne.s32.totalorder %s52, %s66
    %p68 = scmp.eq.s32.totalorder %s21, 0
    %p69 = por %p67, %p68
    %s71 = sadd.s32 %s70, 1
    %p74 = scmp.eq.s32.totalorder %s15, 1
    %p75 = scmp.ne.s32.totalorder %s70, %s72
    %p76 = scmp.eq.s32.totalorder %s15, 0
    %p77 = por %p75, %p76
    %p78 = scmp.ne.s32.totalorder %s70, %s72
    %p79 = scmp.eq.s32.totalorder %s20, 1
    %p80 = por %p78, %p79
    %p81 = scmp.ne.s32.totalorder %s72, %s73
    %p82 = scmp.eq.s32.totalorder %s20, 0
    %p83 = por %p81, %p82
    %p84 = scmp.ne.s32.totalorder %s72, %s73
    %p85 = scmp.eq.s32.totalorder %s21, 1
    %p86 = por %p84, %p85
    %p88 = scmp.ne.s32.totalorder %s73, %s87
    %p89 = scmp.eq.s32.totalorder %s21, 0
    %p90 = por %p88, %p89
    %s92 = sadd.s32 %s91, 1
    %p95 = scmp.eq.s32.totalorder %s15, 1
    %p96 = scmp.ne.s32.totalorder %s91, %s93
    %p97 = scmp.eq.s32.totalorder %s15, 0
    %p98 = por %p96, %p97
    %p99 = scmp.ne.s32.totalorder %s91, %s93
    %p100 = scmp.eq.s32.totalorder %s20, 1
    %p101 = por %p99, %p100
    %p102 = scmp.ne.s32.totalorder %s93, %s94
    %p103 = scmp.eq.s32.totalorder %s20, 0
    %p104 = por %p102, %p103
    %p105 = scmp.ne.s32.totalorder %s93, %s94
    %p106 = scmp.eq.s32.totalorder %s21, 1
    %p107 = por %p105, %p106
    %p109 = scmp.ne.s32.totalorder %s94, %s108
    %p110 = scmp.eq.s32.totalorder %s21, 0
    %p111 = por %p109, %p110
    %s113 = sadd.s32 %s112, 1
    %p116 = scmp.eq.s32.totalorder %s15, 1
    %p117 = scmp.ne.s32.totalorder %s112, %s114
    %p118 = scmp.eq.s32.totalorder %s15, 0
    %p119 = por %p117, %p118
    %p120 = scmp.ne.s32.totalorder %s112, %s114
    %p121 = scmp.eq.s32.totalorder %s20, 1
    %p122 = por %p120, %p121
    %p123 = scmp.ne.s32.totalorder %s114, %s115
    %p124 = scmp.eq.s32.totalorder %s20, 0
    %p125 = por %p123, %p124
    %p126 = scmp.ne.s32.totalorder %s114, %s115
    %p127 = scmp.eq.s32.totalorder %s21, 1
    %p128 = por %p126, %p127
    %p130 = scmp.ne.s32.totalorder %s115, %s129
    %p131 = scmp.eq.s32.totalorder %s21, 0
    %p132 = por %p130, %p131
    %s134 = sadd.s32 %s133, 1
    %p137 = scmp.eq.s32.totalorder %s15, 1
    %p138 = scmp.ne.s32.totalorder %s133, %s135
    %p139 = scmp.eq.s32.totalorder %s15, 0
    %p140 = por %p138, %p139
    %p141 = scmp.ne.s32.totalorder %s133, %s135
    %p142 = scmp.eq.s32.totalorder %s20, 1
    %p143 = por %p141, %p142
    %p144 = scmp.ne.s32.totalorder %s135, %s136
    %p145 = scmp.eq.s32.totalorder %s20, 0
    %p146 = por %p144, %p145
    %p147 = scmp.ne.s32.totalorder %s135, %s136
    %p148 = scmp.eq.s32.totalorder %s21, 1
    %p149 = por %p147, %p148
    %p151 = scmp.ne.s32.totalorder %s136, %s150
    %p152 = scmp.eq.s32.totalorder %s21, 0
    %p153 = por %p151, %p152
    %s155 = sadd.s32 %s154, 1
    %p158 = scmp.eq.s32.totalorder %s15, 1
    %p159 = scmp.ne.s32.totalorder %s154, %s156
    %p160 = scmp.eq.s32.totalorder %s15, 0
    %p161 = por %p159, %p160
    %p162 = scmp.ne.s32.totalorder %s154, %s156
    %p163 = scmp.eq.s32.totalorder %s20, 1
    %p164 = por %p162, %p163
    %p165 = scmp.ne.s32.totalorder %s156, %s157
    %p166 = scmp.eq.s32.totalorder %s20, 0
    %p167 = por %p165, %p166
    %p168 = scmp.ne.s32.totalorder %s156, %s157
    %p169 = scmp.eq.s32.totalorder %s21, 1
    %p170 = por %p168, %p169
    %p172 = scmp.ne.s32.totalorder %s157, %s171
    %p173 = scmp.eq.s32.totalorder %s21, 0
    %p174 = por %p172, %p173
    %s175 = ssub.s32 %s15, %s22
    %p176 = scmp.eq.s32.totalorder %s175, 0
    %s178 = sadd.s32 %s177, 1
    %s179 = scalar_select %p176, %s177, %s178
    %p182 = pneg %p176
    %p183 = scmp.eq.s32.totalorder %s15, 1
    %p184 = por %p182, %p183
    %p185 = scmp.ne.s32.totalorder %s177, %s180
    %p186 = scmp.eq.s32.totalorder %s15, 0
    %p187 = por %p185, %p186
    %p188 = scmp.ne.s32.totalorder %s177, %s180
    %p189 = scmp.eq.s32.totalorder %s20, 1
    %p190 = por %p188, %p189
    %p191 = scmp.ne.s32.totalorder %s180, %s181
    %p192 = scmp.eq.s32.totalorder %s20, 0
    %p193 = por %p191, %p192
    %p194 = scmp.ne.s32.totalorder %s180, %s181
    %p195 = scmp.eq.s32.totalorder %s21, 1
    %p196 = por %p194, %p195
    %p198 = scmp.ne.s32.totalorder %s181, %s197
    %p199 = scmp.eq.s32.totalorder %s21, 0
    %p200 = por %p198, %p199
    %p201 = scmp.le.s32.totalorder 1, %s15
    %p202 = scmp.lt.s32.totalorder %s15, 3
    %p203 = pnand %p201, %p202
    %p204 = pneg %p203
    // Predicated region
    $region9: #{mlp_forward.1} parent=5 // pred_check
      _
    $region10: #{mlp_forward.1} parent=5 // pred_check_branch
      %206 = sbr.rel (%p203) target = $region12
    $region11: #{mlp_forward.1} parent=5 // pred_region
      %s207 = ssub.s32 %s15, 1
      // Predicated region
      $region13: #{mlp_forward.1} parent=11 // pred_check
        %p208 = pneg %p62
      $region14: #{mlp_forward.1} parent=11 // pred_check_branch
        %210 = sbr.rel (%p208) target = $region16
      $region15: #{mlp_forward.1} parent=11 // pred_region
        _
      $region16: #{mlp_forward.1} parent=11 // pred_fallthru
        _
      // Predicated region
      $region17: #{mlp_forward.1} parent=11 // pred_check
        %p211 = pneg %p83
      $region18: #{mlp_forward.1} parent=11 // pred_check_branch
        %213 = sbr.rel (%p211) target = $region20
      $region19: #{mlp_forward.1} parent=11 // pred_region
        _
      $region20: #{mlp_forward.1} parent=11 // pred_fallthru
        _
      // Predicated region
      $region21: #{mlp_forward.1} parent=11 // pred_check
        %p214 = pneg %p104
      $region22: #{mlp_forward.1} parent=11 // pred_check_branch
        %216 = sbr.rel (%p214) target = $region24
      $region23: #{mlp_forward.1} parent=11 // pred_region
        _
      $region24: #{mlp_forward.1} parent=11 // pred_fallthru
        _
      // Predicated region
      $region25: #{mlp_forward.1} parent=11 // pred_check
        %p217 = pneg %p125
      $region26: #{mlp_forward.1} parent=11 // pred_check_branch
        %219 = sbr.rel (%p217) target = $region28
      $region27: #{mlp_forward.1} parent=11 // pred_region
        _
      $region28: #{mlp_forward.1} parent=11 // pred_fallthru
        _
      // Predicated region
      $region29: #{mlp_forward.1} parent=11 // pred_check
        %p220 = pneg %p146
      $region30: #{mlp_forward.1} parent=11 // pred_check_branch
        %222 = sbr.rel (%p220) target = $region32
      $region31: #{mlp_forward.1} parent=11 // pred_region
        _
      $region32: #{mlp_forward.1} parent=11 // pred_fallthru
        _
      // Predicated region
      $region33: #{mlp_forward.1} parent=11 // pred_check
        %p223 = pneg %p167
      $region34: #{mlp_forward.1} parent=11 // pred_check_branch
        %225 = sbr.rel (%p223) target = $region36
      $region35: #{mlp_forward.1} parent=11 // pred_region
        _
      $region36: #{mlp_forward.1} parent=11 // pred_fallthru
        _
    $region12: #{mlp_forward.1} parent=5 // pred_fallthru
      _
    %p226 = scmp.lt.s32.totalorder %s15, 2
    // Predicated region
    $region37: #{mlp_forward.1} parent=5 // pred_check
      %p227 = pneg %p226
    $region38: #{mlp_forward.1} parent=5 // pred_check_branch
      %229 = sbr.rel (%p227) target = $region40
    $region39: #{mlp_forward.1} parent=5 // pred_region
      // Predicated region
      $region41: #{mlp_forward.1} parent=39 // pred_check
        %p230 = pneg %p35
      $region42: #{mlp_forward.1} parent=39 // pred_check_branch
        %232 = sbr.rel (%p230) target = $region44
      $region43: #{mlp_forward.1} parent=39 // pred_region
        %s233 = smul.u32 64, %s15
        %p234 = scmp.lt.s32.totalorder %s233, 127
        %s235 = scalar_select %p234, %s233, 127
        %s236 = smul.addr %s235, 8
        %s237 = scalar_lea.vmem %s0, %s236
        %s238 = smul.u32 64, %s15
      $region44: #{mlp_forward.1} parent=39 // pred_fallthru
        _
    $region40: #{mlp_forward.1} parent=5 // pred_fallthru
      _
    %p239 = scmp.le.s32.totalorder 1, %s15
    %p240 = scmp.lt.s32.totalorder %s15, 3
    %p241 = pnand %p239, %p240
    %p242 = pneg %p241
    // Predicated region
    $region45: #{mlp_forward.1} parent=5 // pred_check
      _
    $region46: #{mlp_forward.1} parent=5 // pred_check_branch
      %244 = sbr.rel (%p241) target = $region48
    $region47: #{mlp_forward.1} parent=5 // pred_region
      %s245 = ssub.s32 %s15, 1
      %s246 = smul.u32 64, %s20
      %p247 = scmp.lt.s32.totalorder %s246, 127
      %s248 = scalar_select %p247, %s246, 127
      %s249 = smul.addr %s248, 8
      %s250 = scalar_lea.vmem %s0, %s249
      %p251 = pneg %p41
      %p252 = pneg %p38
      %p253 = pneg %p62
      %p254 = pneg %p59
      %p255 = pneg %p83
      %p256 = pneg %p80
      %p257 = pneg %p104
      %p258 = pneg %p101
      %p259 = pneg %p125
      %p260 = pneg %p122
      %p261 = pneg %p146
      %p262 = pneg %p143
      %p263 = pneg %p167
      %p264 = pneg %p164
      %p265 = pneg %p193
      %p266 = pneg %p190
      %s267 = smul.u32 64, %s20
      %p268 = scmp.lt.s32.totalorder %s267, 127
      %s269 = scalar_select %p268, %s267, 127
      %s270 = smul.addr %s269, 8
      %s271 = scalar_lea.vmem %s7, %s270
      %s272 = smul.u32 64, %s20
      %p273 = scmp.lt.s32.totalorder %s272, 127
      %s274 = scalar_select %p273, %s272, 127
      %s275 = smul.addr %s274, 8
      %s276 = scalar_lea.vmem %s0, %s275
      %s277 = smul.u32 64, %s20
      %s278 = smul.u32 64, %s20
      %p279 = scmp.lt.s32.totalorder %s278, 127
      %s280 = scalar_select %p279, %s278, 127
      %s281 = smul.addr %s280, 8
      %s282 = scalar_lea.vmem %s7, %s281
      %s283 = smul.u32 64, %s20
      %v284 = vld [vmem:[%s276] sm:$0xff]
      %v285 = vld [vmem:[%s276 + $0x8] sm:$0xff]
      %v286 = vld [vmem:[%s276 + $0x10] sm:$0xff]
      %v287 = vld [vmem:[%s276 + $0x18] sm:$0xff]
      %v288 = vld [vmem:[%s276 + $0x20] sm:$0xff]
      %v289 = vld [vmem:[%s276 + $0x28] sm:$0xff]
      %v290 = vld [vmem:[%s276 + $0x30] sm:$0xff]
      %v291 = vld [vmem:[%s276 + $0x38] sm:$0xff]
      %v292 = vld [vmem:[%s276 + $0x40] sm:$0xff]
      %v293 = vld [vmem:[%s276 + $0x48] sm:$0xff]
      %v294 = vld [vmem:[%s276 + $0x50] sm:$0xff]
      %v295 = vld [vmem:[%s276 + $0x58] sm:$0xff]
      %v296 = vld [vmem:[%s276 + $0x60] sm:$0xff]
      %v297 = vld [vmem:[%s276 + $0x68] sm:$0xff]
      %v298 = vld [vmem:[%s276 + $0x70] sm:$0xff]
      %v299 = vld [vmem:[%s276 + $0x78] sm:$0xff]
      %v300 = vld [vmem:[%s276 + $0x80] sm:$0xff]
      %v301 = vld [vmem:[%s276 + $0x88] sm:$0xff]
      %v302 = vld [vmem:[%s276 + $0x90] sm:$0xff]
      %v303 = vld [vmem:[%s276 + $0x98] sm:$0xff]
      %v304 = vld [vmem:[%s276 + $0xa0] sm:$0xff]
      %v305 = vld [vmem:[%s276 + $0xa8] sm:$0xff]
      %v306 = vld [vmem:[%s276 + $0xb0] sm:$0xff]
      %v307 = vld [vmem:[%s276 + $0xb8] sm:$0xff]
      %v308 = vld [vmem:[%s276 + $0xc0] sm:$0xff]
      %v309 = vld [vmem:[%s276 + $0xc8] sm:$0xff]
      %v310 = vld [vmem:[%s276 + $0xd0] sm:$0xff]
      %v311 = vld [vmem:[%s276 + $0xd8] sm:$0xff]
      %v312 = vld [vmem:[%s276 + $0xe0] sm:$0xff]
      %v313 = vld [vmem:[%s276 + $0xe8] sm:$0xff]
      %v314 = vld [vmem:[%s276 + $0xf0] sm:$0xff]
      %v315 = vld [vmem:[%s276 + $0xf8] sm:$0xff]
      %v316 = vld [vmem:[%s276 + $0x100] sm:$0xff]
      %v317 = vld [vmem:[%s276 + $0x108] sm:$0xff]
      %v318 = vld [vmem:[%s276 + $0x110] sm:$0xff]
      %v319 = vld [vmem:[%s276 + $0x118] sm:$0xff]
      %v320 = vld [vmem:[%s276 + $0x120] sm:$0xff]
      %v321 = vld [vmem:[%s276 + $0x128] sm:$0xff]
      %v322 = vld [vmem:[%s276 + $0x130] sm:$0xff]
      %v323 = vld [vmem:[%s276 + $0x138] sm:$0xff]
      %v324 = vld [vmem:[%s276 + $0x140] sm:$0xff]
      %v325 = vld [vmem:[%s276 + $0x148] sm:$0xff]
      %v326 = vld [vmem:[%s276 + $0x150] sm:$0xff]
      %v327 = vld [vmem:[%s276 + $0x158] sm:$0xff]
      %v328 = vld [vmem:[%s276 + $0x160] sm:$0xff]
      %v329 = vld [vmem:[%s276 + $0x168] sm:$0xff]
      %v330 = vld [vmem:[%s276 + $0x170] sm:$0xff]
      %v331 = vld [vmem:[%s276 + $0x178] sm:$0xff]
      %v332 = vld [vmem:[%s276 + $0x180] sm:$0xff]
      %v333 = vld [vmem:[%s276 + $0x188] sm:$0xff]
      %v334 = vld [vmem:[%s276 + $0x190] sm:$0xff]
      %v335 = vld [vmem:[%s276 + $0x198] sm:$0xff]
      %v336 = vld [vmem:[%s276 + $0x1a0] sm:$0xff]
      %v337 = vld [vmem:[%s276 + $0x1a8] sm:$0xff]
      %v338 = vld [vmem:[%s276 + $0x1b0] sm:$0xff]
      %v339 = vld [vmem:[%s276 + $0x1b8] sm:$0xff]
      %v340 = vld [vmem:[%s276 + $0x1c0] sm:$0xff]
      %v341 = vld [vmem:[%s276 + $0x1c8] sm:$0xff]
      %v342 = vld [vmem:[%s276 + $0x1d0] sm:$0xff]
      %v343 = vld [vmem:[%s276 + $0x1d8] sm:$0xff]
      %v344 = vld [vmem:[%s276 + $0x1e0] sm:$0xff]
      %v345 = vld [vmem:[%s276 + $0x1e8] sm:$0xff]
      %v346 = vld [vmem:[%s276 + $0x1f0] sm:$0xff]
      %v347 = vld [vmem:[%s276 + $0x1f8] sm:$0xff]
      %v348 = vld [vmem:[%s1] sm:$0xff]
      %v349 = vld [vmem:[%s1 + $0x8] sm:$0xff]
      %v350 = vld [vmem:[%s2] sm:$0x1]
      %v352 = vlaneseq
      %v353 = vshrl.u32 %v352, 7
      %v354 = vsub.s32 0, %v353
      %v355 = vrot.slane %v350, %v354
      %vm357 = vcmask 130048
      %v359 = vsel %vm357, %v284, 0
      %v362 = vsel %vm357, %v285, 0
      %v365 = vsel %vm357, %v286, 0
      %v368 = vsel %vm357, %v287, 0
      %v371 = vsel %vm357, %v288, 0
      %v374 = vsel %vm357, %v289, 0
      %v377 = vsel %vm357, %v290, 0
      %v380 = vsel %vm357, %v291, 0
      %v383 = vsel %vm357, %v292, 0
      %v386 = vsel %vm357, %v293, 0
      %v389 = vsel %vm357, %v294, 0
      %v392 = vsel %vm357, %v295, 0
      %v395 = vsel %vm357, %v296, 0
      %v398 = vsel %vm357, %v297, 0
      %v401 = vsel %vm357, %v298, 0
      %v404 = vsel %vm357, %v299, 0
      %v407 = vsel %vm357, %v300, 0
      %v410 = vsel %vm357, %v301, 0
      %v413 = vsel %vm357, %v302, 0
      %v416 = vsel %vm357, %v303, 0
      %v419 = vsel %vm357, %v304, 0
      %v422 = vsel %vm357, %v305, 0
      %v425 = vsel %vm357, %v306, 0
      %v428 = vsel %vm357, %v307, 0
      %v431 = vsel %vm357, %v308, 0
      %v434 = vsel %vm357, %v309, 0
      %v437 = vsel %vm357, %v310, 0
      %v440 = vsel %vm357, %v311, 0
      %v443 = vsel %vm357, %v312, 0
      %v446 = vsel %vm357, %v313, 0
      %v449 = vsel %vm357, %v314, 0
      %v452 = vsel %vm357, %v315, 0
      %v455 = vsel %vm357, %v316, 0
      %v458 = vsel %vm357, %v317, 0
      %v461 = vsel %vm357, %v318, 0
      %v464 = vsel %vm357, %v319, 0
      %v467 = vsel %vm357, %v320, 0
      %v470 = vsel %vm357, %v321, 0
      %v473 = vsel %vm357, %v322, 0
      %v476 = vsel %vm357, %v323, 0
      %v479 = vsel %vm357, %v324, 0
      %v482 = vsel %vm357, %v325, 0
      %v485 = vsel %vm357, %v326, 0
      %v488 = vsel %vm357, %v327, 0
      %v491 = vsel %vm357, %v328, 0
      %v494 = vsel %vm357, %v329, 0
      %v497 = vsel %vm357, %v330, 0
      %v500 = vsel %vm357, %v331, 0
      %v503 = vsel %vm357, %v332, 0
      %v506 = vsel %vm357, %v333, 0
      %v509 = vsel %vm357, %v334, 0
      %v512 = vsel %vm357, %v335, 0
      %v515 = vsel %vm357, %v336, 0
      %v518 = vsel %vm357, %v337, 0
      %v521 = vsel %vm357, %v338, 0
      %v524 = vsel %vm357, %v339, 0
      %v527 = vsel %vm357, %v340, 0
      %v530 = vsel %vm357, %v341, 0
      %v533 = vsel %vm357, %v342, 0
      %v536 = vsel %vm357, %v343, 0
      %v539 = vsel %vm357, %v344, 0
      %v542 = vsel %vm357, %v345, 0
      %v545 = vsel %vm357, %v346, 0
      %v548 = vsel %vm357, %v347, 0
      %550 = vmatprep.subr.mxu0 0.0
      %551 = vmatpush1.msra.mxu0 %v348
      %552 = vmatprep.subr.mxu0 0.0
      %553 = vmatpush1.msra.mxu0 %v349
      %554 = vmatprep.subr.mxu0 0.0
      %555 = vmatpush1.msra.mxu0 0.0
      %556 = vmatprep.subr.mxu0 0.0
      %557 = vmatpush1.msra.mxu0 0.0
      %558 = vmatprep.subr.mxu0 0.0
      %559 = vmatpush1.msra.mxu0 0.0
      %560 = vmatprep.subr.mxu0 0.0
      %561 = vmatpush1.msra.mxu0 0.0
      %562 = vmatprep.subr.mxu0 0.0
      %563 = vmatpush1.msra.mxu0 0.0
      %564 = vmatprep.subr.mxu0 0.0
      %565 = vmatpush1.msra.mxu0 0.0
      %566 = vmatprep.subr.mxu0 0.0
      %567 = vmatpush1.msra.mxu0 0.0
      %568 = vmatprep.subr.mxu0 0.0
      %569 = vmatpush1.msra.mxu0 0.0
      %570 = vmatprep.subr.mxu0 0.0
      %571 = vmatpush1.msra.mxu0 0.0
      %572 = vmatprep.subr.mxu0 0.0
      %573 = vmatpush1.msra.mxu0 0.0
      %574 = vmatprep.subr.mxu0 0.0
      %575 = vmatpush1.msra.mxu0 0.0
      %576 = vmatprep.subr.mxu0 0.0
      %577 = vmatpush1.msra.mxu0 0.0
      %578 = vmatprep.subr.mxu0 0.0
      %579 = vmatpush1.msra.mxu0 0.0
      %580 = vmatprep.subr.mxu0 0.0
      %581 = vmatpush1.msra.mxu0 0.0
      %582 = vmatprep.subr.mxu0 0.0
      %583 = vmatpush1.msra.mxu0 0.0
      %584 = vmatprep.subr.mxu0 0.0
      %585 = vmatpush1.msra.mxu0 0.0
      %586 = vmatprep.subr.mxu0 0.0
      %587 = vmatpush1.msra.mxu0 0.0
      %588 = vmatprep.subr.mxu0 0.0
      %589 = vmatpush1.msra.mxu0 0.0
      %590 = vmatprep.subr.mxu0 0.0
      %591 = vmatpush1.msra.mxu0 0.0
      %592 = vmatprep.subr.mxu0 0.0
      %593 = vmatpush1.msra.mxu0 0.0
      %594 = vmatprep.subr.mxu0 0.0
      %595 = vmatpush1.msra.mxu0 0.0
      %596 = vmatprep.subr.mxu0 0.0
      %597 = vmatpush1.msra.mxu0 0.0
      %598 = vmatprep.subr.mxu0 0.0
      %599 = vmatpush1.msra.mxu0 0.0
      %600 = vmatprep.subr.mxu0 0.0
      %601 = vmatpush1.msra.mxu0 0.0
      %602 = vmatprep.subr.mxu0 0.0
      %603 = vmatpush1.msra.mxu0 0.0
      %604 = vmatprep.subr.mxu0 0.0
      %605 = vmatpush1.msra.mxu0 0.0
      %606 = vmatprep.subr.mxu0 0.0
      %607 = vmatpush1.msra.mxu0 0.0
      %608 = vmatprep.subr.mxu0 0.0
      %609 = vmatpush1.msra.mxu0 0.0
      %610 = vmatprep.subr.mxu0 0.0
      %611 = vmatpush1.msra.mxu0 0.0
      %612 = vmatprep.subr.mxu0 0.0
      %613 = vmatpush1.msra.mxu0 0.0
      %614 = vmatprep.mubr.f32.mxu0 0.0
      %615 = vmatmul.mubr.f32.gmra.mrb[0].mxu0 %v359
      %v616 = vpop.f32.mrb[0].mxu0
      %v617 = vadd.f32 %v355, %v616
      %v618 = vpop.f32.mrb[0].mxu0
      %619 = vmatprep.mubr.f32.mxu0 0.0
      %620 = vmatmul.mubr.f32.gmra.mrb[0].mxu0 %v362
      %v621 = vpop.f32.mrb[0].mxu0
      %v622 = vadd.f32 %v355, %v621
      %v623 = vpop.f32.mrb[0].mxu0
      %624 = vmatprep.mubr.f32.mxu0 0.0
      %625 = vmatmul.mubr.f32.gmra.mrb[0].mxu0 %v365
      %v626 = vpop.f32.mrb[0].mxu0
      %v627 = vadd.f32 %v355, %v626
      %v628 = vpop.f32.mrb[0].mxu0
      %629 = vmatprep.mubr.f32.mxu0 0.0
      %630 = vmatmul.mubr.f32.gmra.mrb[0].mxu0 %v368
      %v631 = vpop.f32.mrb[0].mxu0
      %v632 = vadd.f32 %v355, %v631
      %v633 = vpop.f32.mrb[0].mxu0
      %634 = vmatprep.mubr.f32.mxu0 0.0
      %635 = vmatmul.mubr.f32.gmra.mrb[0].mxu0 %v371
      %v636 = vpop.f32.mrb[0].mxu0
      %v637 = vadd.f32 %v355, %v636
      %v638 = vpop.f32.mrb[0].mxu0
      %639 = vmatprep.mubr.f32.mxu0 0.0
      %640 = vmatmul.mubr.f32.gmra.mrb[0].mxu0 %v374
      %v641 = vpop.f32.mrb[0].mxu0
      %v642 = vadd.f32 %v355, %v641
      %v643 = vpop.f32.mrb[0].mxu0
      %644 = vmatprep.mubr.f32.mxu0 0.0
      %645 = vmatmul.mubr.f32.gmra.mrb[0].mxu0 %v377
      %v646 = vpop.f32.mrb[0].mxu0
      %v647 = vadd.f32 %v355, %v646
      %v648 = vpop.f32.mrb[0].mxu0
      %649 = vmatprep.mubr.f32.mxu0 0.0
      %650 = vmatmul.mubr.f32.gmra.mrb[0].mxu0 %v380
      %v651 = vpop.f32.mrb[0].mxu0
      %v652 = vadd.f32 %v355, %v651
      %v653 = vpop.f32.mrb[0].mxu0
      %654 = vmatprep.mubr.f32.mxu0 0.0
      %655 = vmatmul.mubr.f32.gmra.mrb[0].mxu0 %v383
      %v656 = vpop.f32.mrb[0].mxu0
      %v657 = vadd.f32 %v355, %v656
      %v658 = vpop.f32.mrb[0].mxu0
      %659 = vmatprep.mubr.f32.mxu0 0.0
      %660 = vmatmul.mubr.f32.gmra.mrb[0].mxu0 %v386
      %v661 = vpop.f32.mrb[0].mxu0
      %v662 = vadd.f32 %v355, %v661
      %v663 = vpop.f32.mrb[0].mxu0
      %664 = vmatprep.mubr.f32.mxu0 0.0
      %665 = vmatmul.mubr.f32.gmra.mrb[0].mxu0 %v389
      %v666 = vpop.f32.mrb[0].mxu0
      %v667 = vadd.f32 %v355, %v666
      %v668 = vpop.f32.mrb[0].mxu0
      %669 = vmatprep.mubr.f32.mxu0 0.0
      %670 = vmatmul.mubr.f32.gmra.mrb[0].mxu0 %v392
      %v671 = vpop.f32.mrb[0].mxu0
      %v672 = vadd.f32 %v355, %v671
      %v673 = vpop.f32.mrb[0].mxu0
      %674 = vmatprep.mubr.f32.mxu0 0.0
      %675 = vmatmul.mubr.f32.gmra.mrb[0].mxu0 %v395
      %v676 = vpop.f32.mrb[0].mxu0
      %v677 = vadd.f32 %v355, %v676
      %v678 = vpop.f32.mrb[0].mxu0
      %679 = vmatprep.mubr.f32.mxu0 0.0
      %680 = vmatmul.mubr.f32.gmra.mrb[0].mxu0 %v398
      %v681 = vpop.f32.mrb[0].mxu0
      %v682 = vadd.f32 %v355, %v681
      %v683 = vpop.f32.mrb[0].mxu0
      %684 = vmatprep.mubr.f32.mxu0 0.0
      %685 = vmatmul.mubr.f32.gmra.mrb[0].mxu0 %v401
      %v686 = vpop.f32.mrb[0].mxu0
      %v687 = vadd.f32 %v355, %v686
      %v688 = vpop.f32.mrb[0].mxu0
      %689 = vmatprep.mubr.f32.mxu0 0.0
      %690 = vmatmul.mubr.f32.gmra.mrb[0].mxu0 %v404
      %v691 = vpop.f32.mrb[0].mxu0
      %v692 = vadd.f32 %v355, %v691
      %v693 = vpop.f32.mrb[0].mxu0
      %694 = vmatprep.mubr.f32.mxu0 0.0
      %695 = vmatmul.mubr.f32.gmra.mrb[0].mxu0 %v407
      %v696 = vpop.f32.mrb[0].mxu0
      %v697 = vadd.f32 %v355, %v696
      %v698 = vpop.f32.mrb[0].mxu0
      %699 = vmatprep.mubr.f32.mxu0 0.0
      %700 = vmatmul.mubr.f32.gmra.mrb[0].mxu0 %v410
      %v701 = vpop.f32.mrb[0].mxu0
      %v702 = vadd.f32 %v355, %v701
      %v703 = vpop.f32.mrb[0].mxu0
      %704 = vmatprep.mubr.f32.mxu0 0.0
      %705 = vmatmul.mubr.f32.gmra.mrb[0].mxu0 %v413
      %v706 = vpop.f32.mrb[0].mxu0
      %v707 = vadd.f32 %v355, %v706
      %v708 = vpop.f32.mrb[0].mxu0
      %709 = vmatprep.mubr.f32.mxu0 0.0
      %710 = vmatmul.mubr.f32.gmra.mrb[0].mxu0 %v416
      %v711 = vpop.f32.mrb[0].mxu0
      %v712 = vadd.f32 %v355, %v711
      %v713 = vpop.f32.mrb[0].mxu0
      %714 = vmatprep.mubr.f32.mxu0 0.0
      %715 = vmatmul.mubr.f32.gmra.mrb[0].mxu0 %v419
      %v716 = vpop.f32.mrb[0].mxu0
      %v717 = vadd.f32 %v355, %v716
      %v718 = vpop.f32.mrb[0].mxu0
      %719 = vmatprep.mubr.f32.mxu0 0.0
      %720 = vmatmul.mubr.f32.gmra.mrb[0].mxu0 %v422
      %v721 = vpop.f32.mrb[0].mxu0
      %v722 = vadd.f32 %v355, %v721
      %v723 = vpop.f32.mrb[0].mxu0
      %724 = vmatprep.mubr.f32.mxu0 0.0
      %725 = vmatmul.mubr.f32.gmra.mrb[0].mxu0 %v425
      %v726 = vpop.f32.mrb[0].mxu0
      %v727 = vadd.f32 %v355, %v726
      %v728 = vpop.f32.mrb[0].mxu0
      %729 = vmatprep.mubr.f32.mxu0 0.0
      %730 = vmatmul.mubr.f32.gmra.mrb[0].mxu0 %v428
      %v731 = vpop.f32.mrb[0].mxu0
      %v732 = vadd.f32 %v355, %v731
      %v733 = vpop.f32.mrb[0].mxu0
      %734 = vmatprep.mubr.f32.mxu0 0.0
      %735 = vmatmul.mubr.f32.gmra.mrb[0].mxu0 %v431
      %v736 = vpop.f32.mrb[0].mxu0
      %v737 = vadd.f32 %v355, %v736
      %v738 = vpop.f32.mrb[0].mxu0
      %739 = vmatprep.mubr.f32.mxu0 0.0
      %740 = vmatmul.mubr.f32.gmra.mrb[0].mxu0 %v434
      %v741 = vpop.f32.mrb[0].mxu0
      %v742 = vadd.f32 %v355, %v741
      %v743 = vpop.f32.mrb[0].mxu0
      %744 = vmatprep.mubr.f32.mxu0 0.0
      %745 = vmatmul.mubr.f32.gmra.mrb[0].mxu0 %v437
      %v746 = vpop.f32.mrb[0].mxu0
      %v747 = vadd.f32 %v355, %v746
      %v748 = vpop.f32.mrb[0].mxu0
      %749 = vmatprep.mubr.f32.mxu0 0.0
      %750 = vmatmul.mubr.f32.gmra.mrb[0].mxu0 %v440
      %v751 = vpop.f32.mrb[0].mxu0
      %v752 = vadd.f32 %v355, %v751
      %v753 = vpop.f32.mrb[0].mxu0
      %754 = vmatprep.mubr.f32.mxu0 0.0
      %755 = vmatmul.mubr.f32.gmra.mrb[0].mxu0 %v443
      %v756 = vpop.f32.mrb[0].mxu0
      %v757 = vadd.f32 %v355, %v756
      %v758 = vpop.f32.mrb[0].mxu0
      %759 = vmatprep.mubr.f32.mxu0 0.0
      %760 = vmatmul.mubr.f32.gmra.mrb[0].mxu0 %v446
      %v761 = vpop.f32.mrb[0].mxu0
      %v762 = vadd.f32 %v355, %v761
      %v763 = vpop.f32.mrb[0].mxu0
      %764 = vmatprep.mubr.f32.mxu0 0.0
      %765 = vmatmul.mubr.f32.gmra.mrb[0].mxu0 %v449
      %v766 = vpop.f32.mrb[0].mxu0
      %v767 = vadd.f32 %v355, %v766
      %v768 = vpop.f32.mrb[0].mxu0
      %769 = vmatprep.mubr.f32.mxu0 0.0
      %770 = vmatmul.mubr.f32.gmra.mrb[0].mxu0 %v452
      %v771 = vpop.f32.mrb[0].mxu0
      %v772 = vadd.f32 %v355, %v771
      %v773 = vpop.f32.mrb[0].mxu0
      %774 = vmatprep.mubr.f32.mxu0 0.0
      %775 = vmatmul.mubr.f32.gmra.mrb[0].mxu0 %v455
      %v776 = vpop.f32.mrb[0].mxu0
      %v777 = vadd.f32 %v355, %v776
      %v778 = vpop.f32.mrb[0].mxu0
      %779 = vmatprep.mubr.f32.mxu0 0.0
      %780 = vmatmul.mubr.f32.gmra.mrb[0].mxu0 %v458
      %v781 = vpop.f32.mrb[0].mxu0
      %v782 = vadd.f32 %v355, %v781
      %v783 = vpop.f32.mrb[0].mxu0
      %784 = vmatprep.mubr.f32.mxu0 0.0
      %785 = vmatmul.mubr.f32.gmra.mrb[0].mxu0 %v461
      %v786 = vpop.f32.mrb[0].mxu0
      %v787 = vadd.f32 %v355, %v786
      %v788 = vpop.f32.mrb[0].mxu0
      %789 = vmatprep.mubr.f32.mxu0 0.0
      %790 = vmatmul.mubr.f32.gmra.mrb[0].mxu0 %v464
      %v791 = vpop.f32.mrb[0].mxu0
      %v792 = vadd.f32 %v355, %v791
      %v793 = vpop.f32.mrb[0].mxu0
      %794 = vmatprep.mubr.f32.mxu0 0.0
      %795 = vmatmul.mubr.f32.gmra.mrb[0].mxu0 %v467
      %v796 = vpop.f32.mrb[0].mxu0
      %v797 = vadd.f32 %v355, %v796
      %v798 = vpop.f32.mrb[0].mxu0
      %799 = vmatprep.mubr.f32.mxu0 0.0
      %800 = vmatmul.mubr.f32.gmra.mrb[0].mxu0 %v470
      %v801 = vpop.f32.mrb[0].mxu0
      %v802 = vadd.f32 %v355, %v801
      %v803 = vpop.f32.mrb[0].mxu0
      %804 = vmatprep.mubr.f32.mxu0 0.0
      %805 = vmatmul.mubr.f32.gmra.mrb[0].mxu0 %v473
      %v806 = vpop.f32.mrb[0].mxu0
      %v807 = vadd.f32 %v355, %v806
      %v808 = vpop.f32.mrb[0].mxu0
      %809 = vmatprep.mubr.f32.mxu0 0.0
      %810 = vmatmul.mubr.f32.gmra.mrb[0].mxu0 %v476
      %v811 = vpop.f32.mrb[0].mxu0
      %v812 = vadd.f32 %v355, %v811
      %v813 = vpop.f32.mrb[0].mxu0
      %814 = vmatprep.mubr.f32.mxu0 0.0
      %815 = vmatmul.mubr.f32.gmra.mrb[0].mxu0 %v479
      %v816 = vpop.f32.mrb[0].mxu0
      %v817 = vadd.f32 %v355, %v816
      %v818 = vpop.f32.mrb[0].mxu0
      %819 = vmatprep.mubr.f32.mxu0 0.0
      %820 = vmatmul.mubr.f32.gmra.mrb[0].mxu0 %v482
      %v821 = vpop.f32.mrb[0].mxu0
      %v822 = vadd.f32 %v355, %v821
      %v823 = vpop.f32.mrb[0].mxu0
      %824 = vmatprep.mubr.f32.mxu0 0.0
      %825 = vmatmul.mubr.f32.gmra.mrb[0].mxu0 %v485
      %v826 = vpop.f32.mrb[0].mxu0
      %v827 = vadd.f32 %v355, %v826
      %v828 = vpop.f32.mrb[0].mxu0
      %829 = vmatprep.mubr.f32.mxu0 0.0
      %830 = vmatmul.mubr.f32.gmra.mrb[0].mxu0 %v488
      %v831 = vpop.f32.mrb[0].mxu0
      %v832 = vadd.f32 %v355, %v831
      %v833 = vpop.f32.mrb[0].mxu0
      %834 = vmatprep.mubr.f32.mxu0 0.0
      %835 = vmatmul.mubr.f32.gmra.mrb[0].mxu0 %v491
      %v836 = vpop.f32.mrb[0].mxu0
      %v837 = vadd.f32 %v355, %v836
      %v838 = vpop.f32.mrb[0].mxu0
      %839 = vmatprep.mubr.f32.mxu0 0.0
      %840 = vmatmul.mubr.f32.gmra.mrb[0].mxu0 %v494
      %v841 = vpop.f32.mrb[0].mxu0
      %v842 = vadd.f32 %v355, %v841
      %v843 = vpop.f32.mrb[0].mxu0
      %844 = vmatprep.mubr.f32.mxu0 0.0
      %845 = vmatmul.mubr.f32.gmra.mrb[0].mxu0 %v497
      %v846 = vpop.f32.mrb[0].mxu0
      %v847 = vadd.f32 %v355, %v846
      %v848 = vpop.f32.mrb[0].mxu0
      %849 = vmatprep.mubr.f32.mxu0 0.0
      %850 = vmatmul.mubr.f32.gmra.mrb[0].mxu0 %v500
      %v851 = vpop.f32.mrb[0].mxu0
      %v852 = vadd.f32 %v355, %v851
      %v853 = vpop.f32.mrb[0].mxu0
      %854 = vmatprep.mubr.f32.mxu0 0.0
      %855 = vmatmul.mubr.f32.gmra.mrb[0].mxu0 %v503
      %v856 = vpop.f32.mrb[0].mxu0
      %v857 = vadd.f32 %v355, %v856
      %v858 = vpop.f32.mrb[0].mxu0
      %859 = vmatprep.mubr.f32.mxu0 0.0
      %860 = vmatmul.mubr.f32.gmra.mrb[0].mxu0 %v506
      %v861 = vpop.f32.mrb[0].mxu0
      %v862 = vadd.f32 %v355, %v861
      %v863 = vpop.f32.mrb[0].mxu0
      %864 = vmatprep.mubr.f32.mxu0 0.0
      %865 = vmatmul.mubr.f32.gmra.mrb[0].mxu0 %v509
      %v866 = vpop.f32.mrb[0].mxu0
      %v867 = vadd.f32 %v355, %v866
      %v868 = vpop.f32.mrb[0].mxu0
      %869 = vmatprep.mubr.f32.mxu0 0.0
      %870 = vmatmul.mubr.f32.gmra.mrb[0].mxu0 %v512
      %v871 = vpop.f32.mrb[0].mxu0
      %v872 = vadd.f32 %v355, %v871
      %v873 = vpop.f32.mrb[0].mxu0
      %874 = vmatprep.mubr.f32.mxu0 0.0
      %875 = vmatmul.mubr.f32.gmra.mrb[0].mxu0 %v515
      %v876 = vpop.f32.mrb[0].mxu0
      %v877 = vadd.f32 %v355, %v876
      %v878 = vpop.f32.mrb[0].mxu0
      %879 = vmatprep.mubr.f32.mxu0 0.0
      %880 = vmatmul.mubr.f32.gmra.mrb[0].mxu0 %v518
      %v881 = vpop.f32.mrb[0].mxu0
      %v882 = vadd.f32 %v355, %v881
      %v883 = vpop.f32.mrb[0].mxu0
      %884 = vmatprep.mubr.f32.mxu0 0.0
      %885 = vmatmul.mubr.f32.gmra.mrb[0].mxu0 %v521
      %v886 = vpop.f32.mrb[0].mxu0
      %v887 = vadd.f32 %v355, %v886
      %v888 = vpop.f32.mrb[0].mxu0
      %889 = vmatprep.mubr.f32.mxu0 0.0
      %890 = vmatmul.mubr.f32.gmra.mrb[0].mxu0 %v524
      %v891 = vpop.f32.mrb[0].mxu0
      %v892 = vadd.f32 %v355, %v891
      %v893 = vpop.f32.mrb[0].mxu0
      %894 = vmatprep.mubr.f32.mxu0 0.0
      %895 = vmatmul.mubr.f32.gmra.mrb[0].mxu0 %v527
      %v896 = vpop.f32.mrb[0].mxu0
      %v897 = vadd.f32 %v355, %v896
      %v898 = vpop.f32.mrb[0].mxu0
      %899 = vmatprep.mubr.f32.mxu0 0.0
      %900 = vmatmul.mubr.f32.gmra.mrb[0].mxu0 %v530
      %v901 = vpop.f32.mrb[0].mxu0
      %v902 = vadd.f32 %v355, %v901
      %v903 = vpop.f32.mrb[0].mxu0
      %904 = vmatprep.mubr.f32.mxu0 0.0
      %905 = vmatmul.mubr.f32.gmra.mrb[0].mxu0 %v533
      %v906 = vpop.f32.mrb[0].mxu0
      %v907 = vadd.f32 %v355, %v906
      %v908 = vpop.f32.mrb[0].mxu0
      %909 = vmatprep.mubr.f32.mxu0 0.0
      %910 = vmatmul.mubr.f32.gmra.mrb[0].mxu0 %v536
      %v911 = vpop.f32.mrb[0].mxu0
      %v912 = vadd.f32 %v355, %v911
      %v913 = vpop.f32.mrb[0].mxu0
      %914 = vmatprep.mubr.f32.mxu0 0.0
      %915 = vmatmul.mubr.f32.gmra.mrb[0].mxu0 %v539
      %v916 = vpop.f32.mrb[0].mxu0
      %v917 = vadd.f32 %v355, %v916
      %v918 = vpop.f32.mrb[0].mxu0
      %919 = vmatprep.mubr.f32.mxu0 0.0
      %920 = vmatmul.mubr.f32.gmra.mrb[0].mxu0 %v542
      %v921 = vpop.f32.mrb[0].mxu0
      %v922 = vadd.f32 %v355, %v921
      %v923 = vpop.f32.mrb[0].mxu0
      %924 = vmatprep.mubr.f32.mxu0 0.0
      %925 = vmatmul.mubr.f32.gmra.mrb[0].mxu0 %v545
      %v926 = vpop.f32.mrb[0].mxu0
      %v927 = vadd.f32 %v355, %v926
      %v928 = vpop.f32.mrb[0].mxu0
      %929 = vmatprep.mubr.f32.mxu0 0.0
      %930 = vmatmul.mubr.f32.gmra.mrb[0].mxu0 %v548
      %v931 = vpop.f32.mrb[0].mxu0
      %v932 = vadd.f32 %v355, %v931
      %v933 = vpop.f32.mrb[0].mxu0
      %934 = vdwg.mxu0
      %v935 = vmax.f32 %v617, 0.0
      %v936 = vmax.f32 %v622, 0.0
      %v937 = vmax.f32 %v627, 0.0
      %v938 = vmax.f32 %v632, 0.0
      %v939 = vmax.f32 %v637, 0.0
      %v940 = vmax.f32 %v642, 0.0
      %v941 = vmax.f32 %v647, 0.0
      %v942 = vmax.f32 %v652, 0.0
      %v943 = vmax.f32 %v657, 0.0
      %v944 = vmax.f32 %v662, 0.0
      %v945 = vmax.f32 %v667, 0.0
      %v946 = vmax.f32 %v672, 0.0
      %v947 = vmax.f32 %v677, 0.0
      %v948 = vmax.f32 %v682, 0.0
      %v949 = vmax.f32 %v687, 0.0
      %v950 = vmax.f32 %v692, 0.0
      %v951 = vmax.f32 %v697, 0.0
      %v952 = vmax.f32 %v702, 0.0
      %v953 = vmax.f32 %v707, 0.0
      %v954 = vmax.f32 %v712, 0.0
      %v955 = vmax.f32 %v717, 0.0
      %v956 = vmax.f32 %v722, 0.0
      %v957 = vmax.f32 %v727, 0.0
      %v958 = vmax.f32 %v732, 0.0
      %v959 = vmax.f32 %v737, 0.0
      %v960 = vmax.f32 %v742, 0.0
      %v961 = vmax.f32 %v747, 0.0
      %v962 = vmax.f32 %v752, 0.0
      %v963 = vmax.f32 %v757, 0.0
      %v964 = vmax.f32 %v762, 0.0
      %v965 = vmax.f32 %v767, 0.0
      %v966 = vmax.f32 %v772, 0.0
      %v967 = vmax.f32 %v777, 0.0
      %v968 = vmax.f32 %v782, 0.0
      %v969 = vmax.f32 %v787, 0.0
      %v970 = vmax.f32 %v792, 0.0
      %v971 = vmax.f32 %v797, 0.0
      %v972 = vmax.f32 %v802, 0.0
      %v973 = vmax.f32 %v807, 0.0
      %v974 = vmax.f32 %v812, 0.0
      %v975 = vmax.f32 %v817, 0.0
      %v976 = vmax.f32 %v822, 0.0
      %v977 = vmax.f32 %v827, 0.0
      %v978 = vmax.f32 %v832, 0.0
      %v979 = vmax.f32 %v837, 0.0
      %v980 = vmax.f32 %v842, 0.0
      %v981 = vmax.f32 %v847, 0.0
      %v982 = vmax.f32 %v852, 0.0
      %v983 = vmax.f32 %v857, 0.0
      %v984 = vmax.f32 %v862, 0.0
      %v985 = vmax.f32 %v867, 0.0
      %v986 = vmax.f32 %v872, 0.0
      %v987 = vmax.f32 %v877, 0.0
      %v988 = vmax.f32 %v882, 0.0
      %v989 = vmax.f32 %v887, 0.0
      %v990 = vmax.f32 %v892, 0.0
      %v991 = vmax.f32 %v897, 0.0
      %v992 = vmax.f32 %v902, 0.0
      %v993 = vmax.f32 %v907, 0.0
      %v994 = vmax.f32 %v912, 0.0
      %v995 = vmax.f32 %v917, 0.0
      %v996 = vmax.f32 %v922, 0.0
      %v997 = vmax.f32 %v927, 0.0
      %v998 = vmax.f32 %v932, 0.0
      %v999 = vld [vmem:[%s3] sm:$0xff]
      %v1000 = vld [vmem:[%s3 + $0x8] sm:$0xff]
      %v1001 = vld [vmem:[%s3 + $0x10] sm:$0xff]
      %v1002 = vld [vmem:[%s3 + $0x18] sm:$0xff]
      %v1003 = vld [vmem:[%s4] sm:$0x1]
      %v1005 = vlaneseq
      %v1006 = vshrl.u32 %v1005, 7
      %v1007 = vsub.s32 0, %v1006
      %v1008 = vrot.slane %v1003, %v1007
      %vm1010 = vcmask 261120
      %v1012 = vsel %vm1010, %v935, 0
      %v1015 = vsel %vm1010, %v936, 0
      %v1018 = vsel %vm1010, %v937, 0
      %v1021 = vsel %vm1010, %v938, 0
      %v1024 = vsel %vm1010, %v939, 0
      %v1027 = vsel %vm1010, %v940, 0
      %v1030 = vsel %vm1010, %v941, 0
      %v1033 = vsel %vm1010, %v942, 0
      %v1036 = vsel %vm1010, %v943, 0
      %v1039 = vsel %vm1010, %v944, 0
      %v1042 = vsel %vm1010, %v945, 0
      %v1045 = vsel %vm1010, %v946, 0
      %v1048 = vsel %vm1010, %v947, 0
      %v1051 = vsel %vm1010, %v948, 0
      %v1054 = vsel %vm1010, %v949, 0
      %v1057 = vsel %vm1010, %v950, 0
      %v1060 = vsel %vm1010, %v951, 0
      %v1063 = vsel %vm1010, %v952, 0
      %v1066 = vsel %vm1010, %v953, 0
      %v1069 = vsel %vm1010, %v954, 0
      %v1072 = vsel %vm1010, %v955, 0
      %v1075 = vsel %vm1010, %v956, 0
      %v1078 = vsel %vm1010, %v957, 0
      %v1081 = vsel %vm1010, %v958, 0
      %v1084 = vsel %vm1010, %v959, 0
      %v1087 = vsel %vm1010, %v960, 0
      %v1090 = vsel %vm1010, %v961, 0
      %v1093 = vsel %vm1010, %v962, 0
      %v1096 = vsel %vm1010, %v963, 0
      %v1099 = vsel %vm1010, %v964, 0
      %v1102 = vsel %vm1010, %v965, 0
      %v1105 = vsel %vm1010, %v966, 0
      %v1108 = vsel %vm1010, %v967, 0
      %v1111 = vsel %vm1010, %v968, 0
      %v1114 = vsel %vm1010, %v969, 0
      %v1117 = vsel %vm1010, %v970, 0
      %v1120 = vsel %vm1010, %v971, 0
      %v1123 = vsel %vm1010, %v972, 0
      %v1126 = vsel %vm1010, %v973, 0
      %v1129 = vsel %vm1010, %v974, 0
      %v1132 = vsel %vm1010, %v975, 0
      %v1135 = vsel %vm1010, %v976, 0
      %v1138 = vsel %vm1010, %v977, 0
      %v1141 = vsel %vm1010, %v978, 0
      %v1144 = vsel %vm1010, %v979, 0
      %v1147 = vsel %vm1010, %v980, 0
      %v1150 = vsel %vm1010, %v981, 0
      %v1153 = vsel %vm1010, %v982, 0
      %v1156 = vsel %vm1010, %v983, 0
      %v1159 = vsel %vm1010, %v984, 0
      %v1162 = vsel %vm1010, %v985, 0
      %v1165 = vsel %vm1010, %v986, 0
      %v1168 = vsel %vm1010, %v987, 0
      %v1171 = vsel %vm1010, %v988, 0
      %v1174 = vsel %vm1010, %v989, 0
      %v1177 = vsel %vm1010, %v990, 0
      %v1180 = vsel %vm1010, %v991, 0
      %v1183 = vsel %vm1010, %v992, 0
      %v1186 = vsel %vm1010, %v993, 0
      %v1189 = vsel %vm1010, %v994, 0
      %v1192 = vsel %vm1010, %v995, 0
      %v1195 = vsel %vm1010, %v996, 0
      %v1198 = vsel %vm1010, %v997, 0
      %v1201 = vsel %vm1010, %v998, 0
      %1203 = vmatprep.subr.mxu0 0.0
      %1204 = vmatpush1.msra.mxu0 %v999
      %1205 = vmatprep.subr.mxu0 0.0
      %1206 = vmatpush1.msra.mxu0 %v1000
      %1207 = vmatprep.subr.mxu0 0.0
      %1208 = vmatpush1.msra.mxu0 %v1001
      %1209 = vmatprep.subr.mxu0 0.0
      %1210 = vmatpush1.msra.mxu0 %v1002
      %1211 = vmatprep.subr.mxu0 0.0
      %1212 = vmatpush1.msra.mxu0 0.0
      %1213 = vmatprep.subr.mxu0 0.0
      %1214 = vmatpush1.msra.mxu0 0.0
      %1215 = vmatprep.subr.mxu0 0.0
      %1216 = vmatpush1.msra.mxu0 0.0
      %1217 = vmatprep.subr.mxu0 0.0
      %1218 = vmatpush1.msra.mxu0 0.0
      %1219 = vmatprep.subr.mxu0 0.0
      %1220 = vmatpush1.msra.mxu0 0.0
      %1221 = vmatprep.subr.mxu0 0.0
      %1222 = vmatpush1.msra.mxu0 0.0
      %1223 = vmatprep.subr.mxu0 0.0
      %1224 = vmatpush1.msra.mxu0 0.0
      %1225 = vmatprep.subr.mxu0 0.0
      %1226 = vmatpush1.msra.mxu0 0.0
      %1227 = vmatprep.subr.mxu0 0.0
      %1228 = vmatpush1.msra.mxu0 0.0
      %1229 = vmatprep.subr.mxu0 0.0
      %1230 = vmatpush1.msra.mxu0 0.0
      %1231 = vmatprep.subr.mxu0 0.0
      %1232 = vmatpush1.msra.mxu0 0.0
      %1233 = vmatprep.subr.mxu0 0.0
      %1234 = vmatpush1.msra.mxu0 0.0
      %1235 = vmatprep.subr.mxu0 0.0
      %1236 = vmatpush1.msra.mxu0 0.0
      %1237 = vmatprep.subr.mxu0 0.0
      %1238 = vmatpush1.msra.mxu0 0.0
      %1239 = vmatprep.subr.mxu0 0.0
      %1240 = vmatpush1.msra.mxu0 0.0
      %1241 = vmatprep.subr.mxu0 0.0
      %1242 = vmatpush1.msra.mxu0 0.0
      %1243 = vmatprep.subr.mxu0 0.0
      %1244 = vmatpush1.msra.mxu0 0.0
      %1245 = vmatprep.subr.mxu0 0.0
      %1246 = vmatpush1.msra.mxu0 0.0
      %1247 = vmatprep.subr.mxu0 0.0
      %1248 = vmatpush1.msra.mxu0 0.0
      %1249 = vmatprep.subr.mxu0 0.0
      %1250 = vmatpush1.msra.mxu0 0.0
      %1251 = vmatprep.subr.mxu0 0.0
      %1252 = vmatpush1.msra.mxu0 0.0
      %1253 = vmatprep.subr.mxu0 0.0
      %1254 = vmatpush1.msra.mxu0 0.0
      %1255 = vmatprep.subr.mxu0 0.0
      %1256 = vmatpush1.msra.mxu0 0.0
      %1257 = vmatprep.subr.mxu0 0.0
      %1258 = vmatpush1.msra.mxu0 0.0
      %1259 = vmatprep.subr.mxu0 0.0
      %1260 = vmatpush1.msra.mxu0 0.0
      %1261 = vmatprep.subr.mxu0 0.0
      %1262 = vmatpush1.msra.mxu0 0.0
      %1263 = vmatprep.subr.mxu0 0.0
      %1264 = vmatpush1.msra.mxu0 0.0
      %1265 = vmatprep.subr.mxu0 0.0
      %1266 = vmatpush1.msra.mxu0 0.0
      %1267 = vmatprep.mubr.f32.mxu0 0.0
      %1268 = vmatmul.mubr.f32.gmra.mrb[0].mxu0 %v1012
      %v1269 = vpop.f32.mrb[0].mxu0
      %v1270 = vadd.f32 %v1008, %v1269
      %v1271 = vpop.f32.mrb[0].mxu0
      %1272 = vmatprep.mubr.f32.mxu0 0.0
      %1273 = vmatmul.mubr.f32.gmra.mrb[0].mxu0 %v1015
      %v1274 = vpop.f32.mrb[0].mxu0
      %v1275 = vadd.f32 %v1008, %v1274
      %v1276 = vpop.f32.mrb[0].mxu0
      %1277 = vmatprep.mubr.f32.mxu0 0.0
      %1278 = vmatmul.mubr.f32.gmra.mrb[0].mxu0 %v1018
      %v1279 = vpop.f32.mrb[0].mxu0
      %v1280 = vadd.f32 %v1008, %v1279
      %v1281 = vpop.f32.mrb[0].mxu0
      %1282 = vmatprep.mubr.f32.mxu0 0.0
      %1283 = vmatmul.mubr.f32.gmra.mrb[0].mxu0 %v1021
      %v1284 = vpop.f32.mrb[0].mxu0
      %v1285 = vadd.f32 %v1008, %v1284
      %v1286 = vpop.f32.mrb[0].mxu0
      %1287 = vmatprep.mubr.f32.mxu0 0.0
      %1288 = vmatmul.mubr.f32.gmra.mrb[0].mxu0 %v1024
      %v1289 = vpop.f32.mrb[0].mxu0
      %v1290 = vadd.f32 %v1008, %v1289
      %v1291 = vpop.f32.mrb[0].mxu0
      %1292 = vmatprep.mubr.f32.mxu0 0.0
      %1293 = vmatmul.mubr.f32.gmra.mrb[0].mxu0 %v1027
      %v1294 = vpop.f32.mrb[0].mxu0
      %v1295 = vadd.f32 %v1008, %v1294
      %v1296 = vpop.f32.mrb[0].mxu0
      %1297 = vmatprep.mubr.f32.mxu0 0.0
      %1298 = vmatmul.mubr.f32.gmra.mrb[0].mxu0 %v1030
      %v1299 = vpop.f32.mrb[0].mxu0
      %v1300 = vadd.f32 %v1008, %v1299
      %v1301 = vpop.f32.mrb[0].mxu0
      %1302 = vmatprep.mubr.f32.mxu0 0.0
      %1303 = vmatmul.mubr.f32.gmra.mrb[0].mxu0 %v1033
      %v1304 = vpop.f32.mrb[0].mxu0
      %v1305 = vadd.f32 %v1008, %v1304
      %v1306 = vpop.f32.mrb[0].mxu0
      %1307 = vmatprep.mubr.f32.mxu0 0.0
      %1308 = vmatmul.mubr.f32.gmra.mrb[0].mxu0 %v1036
      %v1309 = vpop.f32.mrb[0].mxu0
      %v1310 = vadd.f32 %v1008, %v1309
      %v1311 = vpop.f32.mrb[0].mxu0
      %1312 = vmatprep.mubr.f32.mxu0 0.0
      %1313 = vmatmul.mubr.f32.gmra.mrb[0].mxu0 %v1039
      %v1314 = vpop.f32.mrb[0].mxu0
      %v1315 = vadd.f32 %v1008, %v1314
      %v1316 = vpop.f32.mrb[0].mxu0
      %1317 = vmatprep.mubr.f32.mxu0 0.0
      %1318 = vmatmul.mubr.f32.gmra.mrb[0].mxu0 %v1042
      %v1319 = vpop.f32.mrb[0].mxu0
      %v1320 = vadd.f32 %v1008, %v1319
      %v1321 = vpop.f32.mrb[0].mxu0
      %1322 = vmatprep.mubr.f32.mxu0 0.0
      %1323 = vmatmul.mubr.f32.gmra.mrb[0].mxu0 %v1045
      %v1324 = vpop.f32.mrb[0].mxu0
      %v1325 = vadd.f32 %v1008, %v1324
      %v1326 = vpop.f32.mrb[0].mxu0
      %1327 = vmatprep.mubr.f32.mxu0 0.0
      %1328 = vmatmul.mubr.f32.gmra.mrb[0].mxu0 %v1048
      %v1329 = vpop.f32.mrb[0].mxu0
      %v1330 = vadd.f32 %v1008, %v1329
      %v1331 = vpop.f32.mrb[0].mxu0
      %1332 = vmatprep.mubr.f32.mxu0 0.0
      %1333 = vmatmul.mubr.f32.gmra.mrb[0].mxu0 %v1051
      %v1334 = vpop.f32.mrb[0].mxu0
      %v1335 = vadd.f32 %v1008, %v1334
      %v1336 = vpop.f32.mrb[0].mxu0
      %1337 = vmatprep.mubr.f32.mxu0 0.0
      %1338 = vmatmul.mubr.f32.gmra.mrb[0].mxu0 %v1054
      %v1339 = vpop.f32.mrb[0].mxu0
      %v1340 = vadd.f32 %v1008, %v1339
      %v1341 = vpop.f32.mrb[0].mxu0
      %1342 = vmatprep.mubr.f32.mxu0 0.0
      %1343 = vmatmul.mubr.f32.gmra.mrb[0].mxu0 %v1057
      %v1344 = vpop.f32.mrb[0].mxu0
      %v1345 = vadd.f32 %v1008, %v1344
      %v1346 = vpop.f32.mrb[0].mxu0
      %1347 = vmatprep.mubr.f32.mxu0 0.0
      %1348 = vmatmul.mubr.f32.gmra.mrb[0].mxu0 %v1060
      %v1349 = vpop.f32.mrb[0].mxu0
      %v1350 = vadd.f32 %v1008, %v1349
      %v1351 = vpop.f32.mrb[0].mxu0
      %1352 = vmatprep.mubr.f32.mxu0 0.0
      %1353 = vmatmul.mubr.f32.gmra.mrb[0].mxu0 %v1063
      %v1354 = vpop.f32.mrb[0].mxu0
      %v1355 = vadd.f32 %v1008, %v1354
      %v1356 = vpop.f32.mrb[0].mxu0
      %1357 = vmatprep.mubr.f32.mxu0 0.0
      %1358 = vmatmul.mubr.f32.gmra.mrb[0].mxu0 %v1066
      %v1359 = vpop.f32.mrb[0].mxu0
      %v1360 = vadd.f32 %v1008, %v1359
      %v1361 = vpop.f32.mrb[0].mxu0
      %1362 = vmatprep.mubr.f32.mxu0 0.0
      %1363 = vmatmul.mubr.f32.gmra.mrb[0].mxu0 %v1069
      %v1364 = vpop.f32.mrb[0].mxu0
      %v1365 = vadd.f32 %v1008, %v1364
      %v1366 = vpop.f32.mrb[0].mxu0
      %1367 = vmatprep.mubr.f32.mxu0 0.0
      %1368 = vmatmul.mubr.f32.gmra.mrb[0].mxu0 %v1072
      %v1369 = vpop.f32.mrb[0].mxu0
      %v1370 = vadd.f32 %v1008, %v1369
      %v1371 = vpop.f32.mrb[0].mxu0
      %1372 = vmatprep.mubr.f32.mxu0 0.0
      %1373 = vmatmul.mubr.f32.gmra.mrb[0].mxu0 %v1075
      %v1374 = vpop.f32.mrb[0].mxu0
      %v1375 = vadd.f32 %v1008, %v1374
      %v1376 = vpop.f32.mrb[0].mxu0
      %1377 = vmatprep.mubr.f32.mxu0 0.0
      %1378 = vmatmul.mubr.f32.gmra.mrb[0].mxu0 %v1078
      %v1379 = vpop.f32.mrb[0].mxu0
      %v1380 = vadd.f32 %v1008, %v1379
      %v1381 = vpop.f32.mrb[0].mxu0
      %1382 = vmatprep.mubr.f32.mxu0 0.0
      %1383 = vmatmul.mubr.f32.gmra.mrb[0].mxu0 %v1081
      %v1384 = vpop.f32.mrb[0].mxu0
      %v1385 = vadd.f32 %v1008, %v1384
      %v1386 = vpop.f32.mrb[0].mxu0
      %1387 = vmatprep.mubr.f32.mxu0 0.0
      %1388 = vmatmul.mubr.f32.gmra.mrb[0].mxu0 %v1084
      %v1389 = vpop.f32.mrb[0].mxu0
      %v1390 = vadd.f32 %v1008, %v1389
      %v1391 = vpop.f32.mrb[0].mxu0
      %1392 = vmatprep.mubr.f32.mxu0 0.0
      %1393 = vmatmul.mubr.f32.gmra.mrb[0].mxu0 %v1087
      %v1394 = vpop.f32.mrb[0].mxu0
      %v1395 = vadd.f32 %v1008, %v1394
      %v1396 = vpop.f32.mrb[0].mxu0
      %1397 = vmatprep.mubr.f32.mxu0 0.0
      %1398 = vmatmul.mubr.f32.gmra.mrb[0].mxu0 %v1090
      %v1399 = vpop.f32.mrb[0].mxu0
      %v1400 = vadd.f32 %v1008, %v1399
      %v1401 = vpop.f32.mrb[0].mxu0
      %1402 = vmatprep.mubr.f32.mxu0 0.0
      %1403 = vmatmul.mubr.f32.gmra.mrb[0].mxu0 %v1093
      %v1404 = vpop.f32.mrb[0].mxu0
      %v1405 = vadd.f32 %v1008, %v1404
      %v1406 = vpop.f32.mrb[0].mxu0
      %1407 = vmatprep.mubr.f32.mxu0 0.0
      %1408 = vmatmul.mubr.f32.gmra.mrb[0].mxu0 %v1096
      %v1409 = vpop.f32.mrb[0].mxu0
      %v1410 = vadd.f32 %v1008, %v1409
      %v1411 = vpop.f32.mrb[0].mxu0
      %1412 = vmatprep.mubr.f32.mxu0 0.0
      %1413 = vmatmul.mubr.f32.gmra.mrb[0].mxu0 %v1099
      %v1414 = vpop.f32.mrb[0].mxu0
      %v1415 = vadd.f32 %v1008, %v1414
      %v1416 = vpop.f32.mrb[0].mxu0
      %1417 = vmatprep.mubr.f32.mxu0 0.0
      %1418 = vmatmul.mubr.f32.gmra.mrb[0].mxu0 %v1102
      %v1419 = vpop.f32.mrb[0].mxu0
      %v1420 = vadd.f32 %v1008, %v1419
      %v1421 = vpop.f32.mrb[0].mxu0
      %1422 = vmatprep.mubr.f32.mxu0 0.0
      %1423 = vmatmul.mubr.f32.gmra.mrb[0].mxu0 %v1105
      %v1424 = vpop.f32.mrb[0].mxu0
      %v1425 = vadd.f32 %v1008, %v1424
      %v1426 = vpop.f32.mrb[0].mxu0
      %1427 = vmatprep.mubr.f32.mxu0 0.0
      %1428 = vmatmul.mubr.f32.gmra.mrb[0].mxu0 %v1108
      %v1429 = vpop.f32.mrb[0].mxu0
      %v1430 = vadd.f32 %v1008, %v1429
      %v1431 = vpop.f32.mrb[0].mxu0
      %1432 = vmatprep.mubr.f32.mxu0 0.0
      %1433 = vmatmul.mubr.f32.gmra.mrb[0].mxu0 %v1111
      %v1434 = vpop.f32.mrb[0].mxu0
      %v1435 = vadd.f32 %v1008, %v1434
      %v1436 = vpop.f32.mrb[0].mxu0
      %1437 = vmatprep.mubr.f32.mxu0 0.0
      %1438 = vmatmul.mubr.f32.gmra.mrb[0].mxu0 %v1114
      %v1439 = vpop.f32.mrb[0].mxu0
      %v1440 = vadd.f32 %v1008, %v1439
      %v1441 = vpop.f32.mrb[0].mxu0
      %1442 = vmatprep.mubr.f32.mxu0 0.0
      %1443 = vmatmul.mubr.f32.gmra.mrb[0].mxu0 %v1117
      %v1444 = vpop.f32.mrb[0].mxu0
      %v1445 = vadd.f32 %v1008, %v1444
      %v1446 = vpop.f32.mrb[0].mxu0
      %1447 = vmatprep.mubr.f32.mxu0 0.0
      %1448 = vmatmul.mubr.f32.gmra.mrb[0].mxu0 %v1120
      %v1449 = vpop.f32.mrb[0].mxu0
      %v1450 = vadd.f32 %v1008, %v1449
      %v1451 = vpop.f32.mrb[0].mxu0
      %1452 = vmatprep.mubr.f32.mxu0 0.0
      %1453 = vmatmul.mubr.f32.gmra.mrb[0].mxu0 %v1123
      %v1454 = vpop.f32.mrb[0].mxu0
      %v1455 = vadd.f32 %v1008, %v1454
      %v1456 = vpop.f32.mrb[0].mxu0
      %1457 = vmatprep.mubr.f32.mxu0 0.0
      %1458 = vmatmul.mubr.f32.gmra.mrb[0].mxu0 %v1126
      %v1459 = vpop.f32.mrb[0].mxu0
      %v1460 = vadd.f32 %v1008, %v1459
      %v1461 = vpop.f32.mrb[0].mxu0
      %1462 = vmatprep.mubr.f32.mxu0 0.0
      %1463 = vmatmul.mubr.f32.gmra.mrb[0].mxu0 %v1129
      %v1464 = vpop.f32.mrb[0].mxu0
      %v1465 = vadd.f32 %v1008, %v1464
      %v1466 = vpop.f32.mrb[0].mxu0
      %1467 = vmatprep.mubr.f32.mxu0 0.0
      %1468 = vmatmul.mubr.f32.gmra.mrb[0].mxu0 %v1132
      %v1469 = vpop.f32.mrb[0].mxu0
      %v1470 = vadd.f32 %v1008, %v1469
      %v1471 = vpop.f32.mrb[0].mxu0
      %1472 = vmatprep.mubr.f32.mxu0 0.0
      %1473 = vmatmul.mubr.f32.gmra.mrb[0].mxu0 %v1135
      %v1474 = vpop.f32.mrb[0].mxu0
      %v1475 = vadd.f32 %v1008, %v1474
      %v1476 = vpop.f32.mrb[0].mxu0
      %1477 = vmatprep.mubr.f32.mxu0 0.0
      %1478 = vmatmul.mubr.f32.gmra.mrb[0].mxu0 %v1138
      %v1479 = vpop.f32.mrb[0].mxu0
      %v1480 = vadd.f32 %v1008, %v1479
      %v1481 = vpop.f32.mrb[0].mxu0
      %1482 = vmatprep.mubr.f32.mxu0 0.0
      %1483 = vmatmul.mubr.f32.gmra.mrb[0].mxu0 %v1141
      %v1484 = vpop.f32.mrb[0].mxu0
      %v1485 = vadd.f32 %v1008, %v1484
      %v1486 = vpop.f32.mrb[0].mxu0
      %1487 = vmatprep.mubr.f32.mxu0 0.0
      %1488 = vmatmul.mubr.f32.gmra.mrb[0].mxu0 %v1144
      %v1489 = vpop.f32.mrb[0].mxu0
      %v1490 = vadd.f32 %v1008, %v1489
      %v1491 = vpop.f32.mrb[0].mxu0
      %1492 = vmatprep.mubr.f32.mxu0 0.0
      %1493 = vmatmul.mubr.f32.gmra.mrb[0].mxu0 %v1147
      %v1494 = vpop.f32.mrb[0].mxu0
      %v1495 = vadd.f32 %v1008, %v1494
      %v1496 = vpop.f32.mrb[0].mxu0
      %1497 = vmatprep.mubr.f32.mxu0 0.0
      %1498 = vmatmul.mubr.f32.gmra.mrb[0].mxu0 %v1150
      %v1499 = vpop.f32.mrb[0].mxu0
      %v1500 = vadd.f32 %v1008, %v1499
      %v1501 = vpop.f32.mrb[0].mxu0
      %1502 = vmatprep.mubr.f32.mxu0 0.0
      %1503 = vmatmul.mubr.f32.gmra.mrb[0].mxu0 %v1153
      %v1504 = vpop.f32.mrb[0].mxu0
      %v1505 = vadd.f32 %v1008, %v1504
      %v1506 = vpop.f32.mrb[0].mxu0
      %1507 = vmatprep.mubr.f32.mxu0 0.0
      %1508 = vmatmul.mubr.f32.gmra.mrb[0].mxu0 %v1156
      %v1509 = vpop.f32.mrb[0].mxu0
      %v1510 = vadd.f32 %v1008, %v1509
      %v1511 = vpop.f32.mrb[0].mxu0
      %1512 = vmatprep.mubr.f32.mxu0 0.0
      %1513 = vmatmul.mubr.f32.gmra.mrb[0].mxu0 %v1159
      %v1514 = vpop.f32.mrb[0].mxu0
      %v1515 = vadd.f32 %v1008, %v1514
      %v1516 = vpop.f32.mrb[0].mxu0
      %1517 = vmatprep.mubr.f32.mxu0 0.0
      %1518 = vmatmul.mubr.f32.gmra.mrb[0].mxu0 %v1162
      %v1519 = vpop.f32.mrb[0].mxu0
      %v1520 = vadd.f32 %v1008, %v1519
      %v1521 = vpop.f32.mrb[0].mxu0
      %1522 = vmatprep.mubr.f32.mxu0 0.0
      %1523 = vmatmul.mubr.f32.gmra.mrb[0].mxu0 %v1165
      %v1524 = vpop.f32.mrb[0].mxu0
      %v1525 = vadd.f32 %v1008, %v1524
      %v1526 = vpop.f32.mrb[0].mxu0
      %1527 = vmatprep.mubr.f32.mxu0 0.0
      %1528 = vmatmul.mubr.f32.gmra.mrb[0].mxu0 %v1168
      %v1529 = vpop.f32.mrb[0].mxu0
      %v1530 = vadd.f32 %v1008, %v1529
      %v1531 = vpop.f32.mrb[0].mxu0
      %1532 = vmatprep.mubr.f32.mxu0 0.0
      %1533 = vmatmul.mubr.f32.gmra.mrb[0].mxu0 %v1171
      %v1534 = vpop.f32.mrb[0].mxu0
      %v1535 = vadd.f32 %v1008, %v1534
      %v1536 = vpop.f32.mrb[0].mxu0
      %1537 = vmatprep.mubr.f32.mxu0 0.0
      %1538 = vmatmul.mubr.f32.gmra.mrb[0].mxu0 %v1174
      %v1539 = vpop.f32.mrb[0].mxu0
      %v1540 = vadd.f32 %v1008, %v1539
      %v1541 = vpop.f32.mrb[0].mxu0
      %1542 = vmatprep.mubr.f32.mxu0 0.0
      %1543 = vmatmul.mubr.f32.gmra.mrb[0].mxu0 %v1177
      %v1544 = vpop.f32.mrb[0].mxu0
      %v1545 = vadd.f32 %v1008, %v1544
      %v1546 = vpop.f32.mrb[0].mxu0
      %1547 = vmatprep.mubr.f32.mxu0 0.0
      %1548 = vmatmul.mubr.f32.gmra.mrb[0].mxu0 %v1180
      %v1549 = vpop.f32.mrb[0].mxu0
      %v1550 = vadd.f32 %v1008, %v1549
      %v1551 = vpop.f32.mrb[0].mxu0
      %1552 = vmatprep.mubr.f32.mxu0 0.0
      %1553 = vmatmul.mubr.f32.gmra.mrb[0].mxu0 %v1183
      %v1554 = vpop.f32.mrb[0].mxu0
      %v1555 = vadd.f32 %v1008, %v1554
      %v1556 = vpop.f32.mrb[0].mxu0
      %1557 = vmatprep.mubr.f32.mxu0 0.0
      %1558 = vmatmul.mubr.f32.gmra.mrb[0].mxu0 %v1186
      %v1559 = vpop.f32.mrb[0].mxu0
      %v1560 = vadd.f32 %v1008, %v1559
      %v1561 = vpop.f32.mrb[0].mxu0
      %1562 = vmatprep.mubr.f32.mxu0 0.0
      %1563 = vmatmul.mubr.f32.gmra.mrb[0].mxu0 %v1189
      %v1564 = vpop.f32.mrb[0].mxu0
      %v1565 = vadd.f32 %v1008, %v1564
      %v1566 = vpop.f32.mrb[0].mxu0
      %1567 = vmatprep.mubr.f32.mxu0 0.0
      %1568 = vmatmul.mubr.f32.gmra.mrb[0].mxu0 %v1192
      %v1569 = vpop.f32.mrb[0].mxu0
      %v1570 = vadd.f32 %v1008, %v1569
      %v1571 = vpop.f32.mrb[0].mxu0
      %1572 = vmatprep.mubr.f32.mxu0 0.0
      %1573 = vmatmul.mubr.f32.gmra.mrb[0].mxu0 %v1195
      %v1574 = vpop.f32.mrb[0].mxu0
      %v1575 = vadd.f32 %v1008, %v1574
      %v1576 = vpop.f32.mrb[0].mxu0
      %1577 = vmatprep.mubr.f32.mxu0 0.0
      %1578 = vmatmul.mubr.f32.gmra.mrb[0].mxu0 %v1198
      %v1579 = vpop.f32.mrb[0].mxu0
      %v1580 = vadd.f32 %v1008, %v1579
      %v1581 = vpop.f32.mrb[0].mxu0
      %1582 = vmatprep.mubr.f32.mxu0 0.0
      %1583 = vmatmul.mubr.f32.gmra.mrb[0].mxu0 %v1201
      %v1584 = vpop.f32.mrb[0].mxu0
      %v1585 = vadd.f32 %v1008, %v1584
      %v1586 = vpop.f32.mrb[0].mxu0
      %1587 = vdwg.mxu0
      %v1588 = vmax.f32 %v1270, 0.0
      %v1589 = vmax.f32 %v1275, 0.0
      %v1590 = vmax.f32 %v1280, 0.0
      %v1591 = vmax.f32 %v1285, 0.0
      %v1592 = vmax.f32 %v1290, 0.0
      %v1593 = vmax.f32 %v1295, 0.0
      %v1594 = vmax.f32 %v1300, 0.0
      %v1595 = vmax.f32 %v1305, 0.0
      %v1596 = vmax.f32 %v1310, 0.0
      %v1597 = vmax.f32 %v1315, 0.0
      %v1598 = vmax.f32 %v1320, 0.0
      %v1599 = vmax.f32 %v1325, 0.0
      %v1600 = vmax.f32 %v1330, 0.0
      %v1601 = vmax.f32 %v1335, 0.0
      %v1602 = vmax.f32 %v1340, 0.0
      %v1603 = vmax.f32 %v1345, 0.0
      %v1604 = vmax.f32 %v1350, 0.0
      %v1605 = vmax.f32 %v1355, 0.0
      %v1606 = vmax.f32 %v1360, 0.0
      %v1607 = vmax.f32 %v1365, 0.0
      %v1608 = vmax.f32 %v1370, 0.0
      %v1609 = vmax.f32 %v1375, 0.0
      %v1610 = vmax.f32 %v1380, 0.0
      %v1611 = vmax.f32 %v1385, 0.0
      %v1612 = vmax.f32 %v1390, 0.0
      %v1613 = vmax.f32 %v1395, 0.0
      %v1614 = vmax.f32 %v1400, 0.0
      %v1615 = vmax.f32 %v1405, 0.0
      %v1616 = vmax.f32 %v1410, 0.0
      %v1617 = vmax.f32 %v1415, 0.0
      %v1618 = vmax.f32 %v1420, 0.0
      %v1619 = vmax.f32 %v1425, 0.0
      %v1620 = vmax.f32 %v1430, 0.0
      %v1621 = vmax.f32 %v1435, 0.0
      %v1622 = vmax.f32 %v1440, 0.0
      %v1623 = vmax.f32 %v1445, 0.0
      %v1624 = vmax.f32 %v1450, 0.0
      %v1625 = vmax.f32 %v1455, 0.0
      %v1626 = vmax.f32 %v1460, 0.0
      %v1627 = vmax.f32 %v1465, 0.0
      %v1628 = vmax.f32 %v1470, 0.0
      %v1629 = vmax.f32 %v1475, 0.0
      %v1630 = vmax.f32 %v1480, 0.0
      %v1631 = vmax.f32 %v1485, 0.0
      %v1632 = vmax.f32 %v1490, 0.0
      %v1633 = vmax.f32 %v1495, 0.0
      %v1634 = vmax.f32 %v1500, 0.0
      %v1635 = vmax.f32 %v1505, 0.0
      %v1636 = vmax.f32 %v1510, 0.0
      %v1637 = vmax.f32 %v1515, 0.0
      %v1638 = vmax.f32 %v1520, 0.0
      %v1639 = vmax.f32 %v1525, 0.0
      %v1640 = vmax.f32 %v1530, 0.0
      %v1641 = vmax.f32 %v1535, 0.0
      %v1642 = vmax.f32 %v1540, 0.0
      %v1643 = vmax.f32 %v1545, 0.0
      %v1644 = vmax.f32 %v1550, 0.0
      %v1645 = vmax.f32 %v1555, 0.0
      %v1646 = vmax.f32 %v1560, 0.0
      %v1647 = vmax.f32 %v1565, 0.0
      %v1648 = vmax.f32 %v1570, 0.0
      %v1649 = vmax.f32 %v1575, 0.0
      %v1650 = vmax.f32 %v1580, 0.0
      %v1651 = vmax.f32 %v1585, 0.0
      %v1652 = vld [vmem:[%s5] sm:$0x1]
      %v1653 = vld [vmem:[#allocation2] sm:$0x1]
      %v1655 = vlaneseq
      %v1656 = vshrl.u32 %v1655, 7
      %v1657 = vsub.s32 0, %v1656
      %v1658 = vrot.slane %v1652, %v1657
      %v1660 = vmul.f32 %v1588, %v1658
      %v1661 = vmul.f32 %v1589, %v1658
      %v1662 = vmul.f32 %v1590, %v1658
      %v1663 = vmul.f32 %v1591, %v1658
      %v1664 = vmul.f32 %v1592, %v1658
      %v1665 = vmul.f32 %v1593, %v1658
      %v1666 = vmul.f32 %v1594, %v1658
      %v1667 = vmul.f32 %v1595, %v1658
      %v1668 = vmul.f32 %v1596, %v1658
      %v1669 = vmul.f32 %v1597, %v1658
      %v1670 = vmul.f32 %v1598, %v1658
      %v1671 = vmul.f32 %v1599, %v1658
      %v1672 = vmul.f32 %v1600, %v1658
      %v1673 = vmul.f32 %v1601, %v1658
      %v1674 = vmul.f32 %v1602, %v1658
      %v1675 = vmul.f32 %v1603, %v1658
      %v1676 = vmul.f32 %v1604, %v1658
      %v1677 = vmul.f32 %v1605, %v1658
      %v1678 = vmul.f32 %v1606, %v1658
      %v1679 = vmul.f32 %v1607, %v1658
      %v1680 = vmul.f32 %v1608, %v1658
      %v1681 = vmul.f32 %v1609, %v1658
      %v1682 = vmul.f32 %v1610, %v1658
      %v1683 = vmul.f32 %v1611, %v1658
      %v1684 = vmul.f32 %v1612, %v1658
      %v1685 = vmul.f32 %v1613, %v1658
      %v1686 = vmul.f32 %v1614, %v1658
      %v1687 = vmul.f32 %v1615, %v1658
      %v1688 = vmul.f32 %v1616, %v1658
      %v1689 = vmul.f32 %v1617, %v1658
      %v1690 = vmul.f32 %v1618, %v1658
      %v1691 = vmul.f32 %v1619, %v1658
      %v1692 = vmul.f32 %v1620, %v1658
      %v1693 = vmul.f32 %v1621, %v1658
      %v1694 = vmul.f32 %v1622, %v1658
      %v1695 = vmul.f32 %v1623, %v1658
      %v1696 = vmul.f32 %v1624, %v1658
      %v1697 = vmul.f32 %v1625, %v1658
      %v1698 = vmul.f32 %v1626, %v1658
      %v1699 = vmul.f32 %v1627, %v1658
      %v1700 = vmul.f32 %v1628, %v1658
      %v1701 = vmul.f32 %v1629, %v1658
      %v1702 = vmul.f32 %v1630, %v1658
      %v1703 = vmul.f32 %v1631, %v1658
      %v1704 = vmul.f32 %v1632, %v1658
      %v1705 = vmul.f32 %v1633, %v1658
      %v1706 = vmul.f32 %v1634, %v1658
      %v1707 = vmul.f32 %v1635, %v1658
      %v1708 = vmul.f32 %v1636, %v1658
      %v1709 = vmul.f32 %v1637, %v1658
      %v1710 = vmul.f32 %v1638, %v1658
      %v1711 = vmul.f32 %v1639, %v1658
      %v1712 = vmul.f32 %v1640, %v1658
      %v1713 = vmul.f32 %v1641, %v1658
      %v1714 = vmul.f32 %v1642, %v1658
      %v1715 = vmul.f32 %v1643, %v1658
      %v1716 = vmul.f32 %v1644, %v1658
      %v1717 = vmul.f32 %v1645, %v1658
      %v1718 = vmul.f32 %v1646, %v1658
      %v1719 = vmul.f32 %v1647, %v1658
      %v1720 = vmul.f32 %v1648, %v1658
      %v1721 = vmul.f32 %v1649, %v1658
      %v1722 = vmul.f32 %v1650, %v1658
      %v1723 = vmul.f32 %v1651, %v1658
      %v1724 = vsel %vm357, %v1660, 0.0
      %1725 = vadd.xlane.f32.xlu0 %v1724
      %v1726 = vpop.xlane.xlu0 %1725
      %v1727 = vsel %vm357, %v1661, 0.0
      %1728 = vadd.xlane.f32.xlu0 %v1727
      %v1729 = vpop.xlane.xlu0 %1728
      %v1730 = vsel %vm357, %v1662, 0.0
      %1731 = vadd.xlane.f32.xlu0 %v1730
      %v1732 = vpop.xlane.xlu0 %1731
      %v1733 = vsel %vm357, %v1663, 0.0
      %1734 = vadd.xlane.f32.xlu0 %v1733
      %v1735 = vpop.xlane.xlu0 %1734
      %v1736 = vsel %vm357, %v1664, 0.0
      %1737 = vadd.xlane.f32.xlu0 %v1736
      %v1738 = vpop.xlane.xlu0 %1737
      %v1739 = vsel %vm357, %v1665, 0.0
      %1740 = vadd.xlane.f32.xlu0 %v1739
      %v1741 = vpop.xlane.xlu0 %1740
      %v1742 = vsel %vm357, %v1666, 0.0
      %1743 = vadd.xlane.f32.xlu0 %v1742
      %v1744 = vpop.xlane.xlu0 %1743
      %v1745 = vsel %vm357, %v1667, 0.0
      %1746 = vadd.xlane.f32.xlu0 %v1745
      %v1747 = vpop.xlane.xlu0 %1746
      %v1748 = vsel %vm357, %v1668, 0.0
      %1749 = vadd.xlane.f32.xlu0 %v1748
      %v1750 = vpop.xlane.xlu0 %1749
      %v1751 = vsel %vm357, %v1669, 0.0
      %1752 = vadd.xlane.f32.xlu0 %v1751
      %v1753 = vpop.xlane.xlu0 %1752
      %v1754 = vsel %vm357, %v1670, 0.0
      %1755 = vadd.xlane.f32.xlu0 %v1754
      %v1756 = vpop.xlane.xlu0 %1755
      %v1757 = vsel %vm357, %v1671, 0.0
      %1758 = vadd.xlane.f32.xlu0 %v1757
      %v1759 = vpop.xlane.xlu0 %1758
      %v1760 = vsel %vm357, %v1672, 0.0
      %1761 = vadd.xlane.f32.xlu0 %v1760
      %v1762 = vpop.xlane.xlu0 %1761
      %v1763 = vsel %vm357, %v1673, 0.0
      %1764 = vadd.xlane.f32.xlu0 %v1763
      %v1765 = vpop.xlane.xlu0 %1764
      %v1766 = vsel %vm357, %v1674, 0.0
      %1767 = vadd.xlane.f32.xlu0 %v1766
      %v1768 = vpop.xlane.xlu0 %1767
      %v1769 = vsel %vm357, %v1675, 0.0
      %1770 = vadd.xlane.f32.xlu0 %v1769
      %v1771 = vpop.xlane.xlu0 %1770
      %v1772 = vsel %vm357, %v1676, 0.0
      %1773 = vadd.xlane.f32.xlu0 %v1772
      %v1774 = vpop.xlane.xlu0 %1773
      %v1775 = vsel %vm357, %v1677, 0.0
      %1776 = vadd.xlane.f32.xlu0 %v1775
      %v1777 = vpop.xlane.xlu0 %1776
      %v1778 = vsel %vm357, %v1678, 0.0
      %1779 = vadd.xlane.f32.xlu0 %v1778
      %v1780 = vpop.xlane.xlu0 %1779
      %v1781 = vsel %vm357, %v1679, 0.0
      %1782 = vadd.xlane.f32.xlu0 %v1781
      %v1783 = vpop.xlane.xlu0 %1782
      %v1784 = vsel %vm357, %v1680, 0.0
      %1785 = vadd.xlane.f32.xlu0 %v1784
      %v1786 = vpop.xlane.xlu0 %1785
      %v1787 = vsel %vm357, %v1681, 0.0
      %1788 = vadd.xlane.f32.xlu0 %v1787
      %v1789 = vpop.xlane.xlu0 %1788
      %v1790 = vsel %vm357, %v1682, 0.0
      %1791 = vadd.xlane.f32.xlu0 %v1790
      %v1792 = vpop.xlane.xlu0 %1791
      %v1793 = vsel %vm357, %v1683, 0.0
      %1794 = vadd.xlane.f32.xlu0 %v1793
      %v1795 = vpop.xlane.xlu0 %1794
      %v1796 = vsel %vm357, %v1684, 0.0
      %1797 = vadd.xlane.f32.xlu0 %v1796
      %v1798 = vpop.xlane.xlu0 %1797
      %v1799 = vsel %vm357, %v1685, 0.0
      %1800 = vadd.xlane.f32.xlu0 %v1799
      %v1801 = vpop.xlane.xlu0 %1800
      %v1802 = vsel %vm357, %v1686, 0.0
      %1803 = vadd.xlane.f32.xlu0 %v1802
      %v1804 = vpop.xlane.xlu0 %1803
      %v1805 = vsel %vm357, %v1687, 0.0
      %1806 = vadd.xlane.f32.xlu0 %v1805
      %v1807 = vpop.xlane.xlu0 %1806
      %v1808 = vsel %vm357, %v1688, 0.0
      %1809 = vadd.xlane.f32.xlu0 %v1808
      %v1810 = vpop.xlane.xlu0 %1809
      %v1811 = vsel %vm357, %v1689, 0.0
      %1812 = vadd.xlane.f32.xlu0 %v1811
      %v1813 = vpop.xlane.xlu0 %1812
      %v1814 = vsel %vm357, %v1690, 0.0
      %1815 = vadd.xlane.f32.xlu0 %v1814
      %v1816 = vpop.xlane.xlu0 %1815
      %v1817 = vsel %vm357, %v1691, 0.0
      %1818 = vadd.xlane.f32.xlu0 %v1817
      %v1819 = vpop.xlane.xlu0 %1818
      %v1820 = vsel %vm357, %v1692, 0.0
      %1821 = vadd.xlane.f32.xlu0 %v1820
      %v1822 = vpop.xlane.xlu0 %1821
      %v1823 = vsel %vm357, %v1693, 0.0
      %1824 = vadd.xlane.f32.xlu0 %v1823
      %v1825 = vpop.xlane.xlu0 %1824
      %v1826 = vsel %vm357, %v1694, 0.0
      %1827 = vadd.xlane.f32.xlu0 %v1826
      %v1828 = vpop.xlane.xlu0 %1827
      %v1829 = vsel %vm357, %v1695, 0.0
      %1830 = vadd.xlane.f32.xlu0 %v1829
      %v1831 = vpop.xlane.xlu0 %1830
      %v1832 = vsel %vm357, %v1696, 0.0
      %1833 = vadd.xlane.f32.xlu0 %v1832
      %v1834 = vpop.xlane.xlu0 %1833
      %v1835 = vsel %vm357, %v1697, 0.0
      %1836 = vadd.xlane.f32.xlu0 %v1835
      %v1837 = vpop.xlane.xlu0 %1836
      %v1838 = vsel %vm357, %v1698, 0.0
      %1839 = vadd.xlane.f32.xlu0 %v1838
      %v1840 = vpop.xlane.xlu0 %1839
      %v1841 = vsel %vm357, %v1699, 0.0
      %1842 = vadd.xlane.f32.xlu0 %v1841
      %v1843 = vpop.xlane.xlu0 %1842
      %v1844 = vsel %vm357, %v1700, 0.0
      %1845 = vadd.xlane.f32.xlu0 %v1844
      %v1846 = vpop.xlane.xlu0 %1845
      %v1847 = vsel %vm357, %v1701, 0.0
      %1848 = vadd.xlane.f32.xlu0 %v1847
      %v1849 = vpop.xlane.xlu0 %1848
      %v1850 = vsel %vm357, %v1702, 0.0
      %1851 = vadd.xlane.f32.xlu0 %v1850
      %v1852 = vpop.xlane.xlu0 %1851
      %v1853 = vsel %vm357, %v1703, 0.0
      %1854 = vadd.xlane.f32.xlu0 %v1853
      %v1855 = vpop.xlane.xlu0 %1854
      %v1856 = vsel %vm357, %v1704, 0.0
      %1857 = vadd.xlane.f32.xlu0 %v1856
      %v1858 = vpop.xlane.xlu0 %1857
      %v1859 = vsel %vm357, %v1705, 0.0
      %1860 = vadd.xlane.f32.xlu0 %v1859
      %v1861 = vpop.xlane.xlu0 %1860
      %v1862 = vsel %vm357, %v1706, 0.0
      %1863 = vadd.xlane.f32.xlu0 %v1862
      %v1864 = vpop.xlane.xlu0 %1863
      %v1865 = vsel %vm357, %v1707, 0.0
      %1866 = vadd.xlane.f32.xlu0 %v1865
      %v1867 = vpop.xlane.xlu0 %1866
      %v1868 = vsel %vm357, %v1708, 0.0
      %1869 = vadd.xlane.f32.xlu0 %v1868
      %v1870 = vpop.xlane.xlu0 %1869
      %v1871 = vsel %vm357, %v1709, 0.0
      %1872 = vadd.xlane.f32.xlu0 %v1871
      %v1873 = vpop.xlane.xlu0 %1872
      %v1874 = vsel %vm357, %v1710, 0.0
      %1875 = vadd.xlane.f32.xlu0 %v1874
      %v1876 = vpop.xlane.xlu0 %1875
      %v1877 = vsel %vm357, %v1711, 0.0
      %1878 = vadd.xlane.f32.xlu0 %v1877
      %v1879 = vpop.xlane.xlu0 %1878
      %v1880 = vsel %vm357, %v1712, 0.0
      %1881 = vadd.xlane.f32.xlu0 %v1880
      %v1882 = vpop.xlane.xlu0 %1881
      %v1883 = vsel %vm357, %v1713, 0.0
      %1884 = vadd.xlane.f32.xlu0 %v1883
      %v1885 = vpop.xlane.xlu0 %1884
      %v1886 = vsel %vm357, %v1714, 0.0
      %1887 = vadd.xlane.f32.xlu0 %v1886
      %v1888 = vpop.xlane.xlu0 %1887
      %v1889 = vsel %vm357, %v1715, 0.0
      %1890 = vadd.xlane.f32.xlu0 %v1889
      %v1891 = vpop.xlane.xlu0 %1890
      %v1892 = vsel %vm357, %v1716, 0.0
      %1893 = vadd.xlane.f32.xlu0 %v1892
      %v1894 = vpop.xlane.xlu0 %1893
      %v1895 = vsel %vm357, %v1717, 0.0
      %1896 = vadd.xlane.f32.xlu0 %v1895
      %v1897 = vpop.xlane.xlu0 %1896
      %v1898 = vsel %vm357, %v1718, 0.0
      %1899 = vadd.xlane.f32.xlu0 %v1898
      %v1900 = vpop.xlane.xlu0 %1899
      %v1901 = vsel %vm357, %v1719, 0.0
      %1902 = vadd.xlane.f32.xlu0 %v1901
      %v1903 = vpop.xlane.xlu0 %1902
      %v1904 = vsel %vm357, %v1720, 0.0
      %1905 = vadd.xlane.f32.xlu0 %v1904
      %v1906 = vpop.xlane.xlu0 %1905
      %v1907 = vsel %vm357, %v1721, 0.0
      %1908 = vadd.xlane.f32.xlu0 %v1907
      %v1909 = vpop.xlane.xlu0 %1908
      %v1910 = vsel %vm357, %v1722, 0.0
      %1911 = vadd.xlane.f32.xlu0 %v1910
      %v1912 = vpop.xlane.xlu0 %1911
      %v1913 = vsel %vm357, %v1723, 0.0
      %1914 = vadd.xlane.f32.xlu0 %v1913
      %v1915 = vpop.xlane.xlu0 %1914
      %v1917 = vlaneseq
      %v1918 = vshrl.u32 %v1917, 7
      %v1919 = vsub.s32 0, %v1918
      %v1920 = vrot.slane %v1653, %v1919
      %v1922 = vadd.f32 %v1726, %v1920
      %v1923 = vadd.f32 %v1729, %v1920
      %v1924 = vadd.f32 %v1732, %v1920
      %v1925 = vadd.f32 %v1735, %v1920
      %v1926 = vadd.f32 %v1738, %v1920
      %v1927 = vadd.f32 %v1741, %v1920
      %v1928 = vadd.f32 %v1744, %v1920
      %v1929 = vadd.f32 %v1747, %v1920
      %v1930 = vadd.f32 %v1750, %v1920
      %v1931 = vadd.f32 %v1753, %v1920
      %v1932 = vadd.f32 %v1756, %v1920
      %v1933 = vadd.f32 %v1759, %v1920
      %v1934 = vadd.f32 %v1762, %v1920
      %v1935 = vadd.f32 %v1765, %v1920
      %v1936 = vadd.f32 %v1768, %v1920
      %v1937 = vadd.f32 %v1771, %v1920
      %v1938 = vadd.f32 %v1774, %v1920
      %v1939 = vadd.f32 %v1777, %v1920
      %v1940 = vadd.f32 %v1780, %v1920
      %v1941 = vadd.f32 %v1783, %v1920
      %v1942 = vadd.f32 %v1786, %v1920
      %v1943 = vadd.f32 %v1789, %v1920
      %v1944 = vadd.f32 %v1792, %v1920
      %v1945 = vadd.f32 %v1795, %v1920
      %v1946 = vadd.f32 %v1798, %v1920
      %v1947 = vadd.f32 %v1801, %v1920
      %v1948 = vadd.f32 %v1804, %v1920
      %v1949 = vadd.f32 %v1807, %v1920
      %v1950 = vadd.f32 %v1810, %v1920
      %v1951 = vadd.f32 %v1813, %v1920
      %v1952 = vadd.f32 %v1816, %v1920
      %v1953 = vadd.f32 %v1819, %v1920
      %v1954 = vadd.f32 %v1822, %v1920
      %v1955 = vadd.f32 %v1825, %v1920
      %v1956 = vadd.f32 %v1828, %v1920
      %v1957 = vadd.f32 %v1831, %v1920
      %v1958 = vadd.f32 %v1834, %v1920
      %v1959 = vadd.f32 %v1837, %v1920
      %v1960 = vadd.f32 %v1840, %v1920
      %v1961 = vadd.f32 %v1843, %v1920
      %v1962 = vadd.f32 %v1846, %v1920
      %v1963 = vadd.f32 %v1849, %v1920
      %v1964 = vadd.f32 %v1852, %v1920
      %v1965 = vadd.f32 %v1855, %v1920
      %v1966 = vadd.f32 %v1858, %v1920
      %v1967 = vadd.f32 %v1861, %v1920
      %v1968 = vadd.f32 %v1864, %v1920
      %v1969 = vadd.f32 %v1867, %v1920
      %v1970 = vadd.f32 %v1870, %v1920
      %v1971 = vadd.f32 %v1873, %v1920
      %v1972 = vadd.f32 %v1876, %v1920
      %v1973 = vadd.f32 %v1879, %v1920
      %v1974 = vadd.f32 %v1882, %v1920
      %v1975 = vadd.f32 %v1885, %v1920
      %v1976 = vadd.f32 %v1888, %v1920
      %v1977 = vadd.f32 %v1891, %v1920
      %v1978 = vadd.f32 %v1894, %v1920
      %v1979 = vadd.f32 %v1897, %v1920
      %v1980 = vadd.f32 %v1900, %v1920
      %v1981 = vadd.f32 %v1903, %v1920
      %v1982 = vadd.f32 %v1906, %v1920
      %v1983 = vadd.f32 %v1909, %v1920
      %v1984 = vadd.f32 %v1912, %v1920
      %v1985 = vadd.f32 %v1915, %v1920
      %vm1986 = vcmask 7168
      %1987 = vst.msk [vmem:[%s282] sm:$0xff] %vm1986, %v1922
      %1988 = vst.msk [vmem:[%s282 + $0x8] sm:$0xff] %vm1986, %v1923
      %1989 = vst.msk [vmem:[%s282 + $0x10] sm:$0xff] %vm1986, %v1924
      %1990 = vst.msk [vmem:[%s282 + $0x18] sm:$0xff] %vm1986, %v1925
      %1991 = vst.msk [vmem:[%s282 + $0x20] sm:$0xff] %vm1986, %v1926
      %1992 = vst.msk [vmem:[%s282 + $0x28] sm:$0xff] %vm1986, %v1927
      %1993 = vst.msk [vmem:[%s282 + $0x30] sm:$0xff] %vm1986, %v1928
      %1994 = vst.msk [vmem:[%s282 + $0x38] sm:$0xff] %vm1986, %v1929
      %1995 = vst.msk [vmem:[%s282 + $0x40] sm:$0xff] %vm1986, %v1930
      %1996 = vst.msk [vmem:[%s282 + $0x48] sm:$0xff] %vm1986, %v1931
      %1997 = vst.msk [vmem:[%s282 + $0x50] sm:$0xff] %vm1986, %v1932
      %1998 = vst.msk [vmem:[%s282 + $0x58] sm:$0xff] %vm1986, %v1933
      %1999 = vst.msk [vmem:[%s282 + $0x60] sm:$0xff] %vm1986, %v1934
      %2000 = vst.msk [vmem:[%s282 + $0x68] sm:$0xff] %vm1986, %v1935
      %2001 = vst.msk [vmem:[%s282 + $0x70] sm:$0xff] %vm1986, %v1936
      %2002 = vst.msk [vmem:[%s282 + $0x78] sm:$0xff] %vm1986, %v1937
      %2003 = vst.msk [vmem:[%s282 + $0x80] sm:$0xff] %vm1986, %v1938
      %2004 = vst.msk [vmem:[%s282 + $0x88] sm:$0xff] %vm1986, %v1939
      %2005 = vst.msk [vmem:[%s282 + $0x90] sm:$0xff] %vm1986, %v1940
      %2006 = vst.msk [vmem:[%s282 + $0x98] sm:$0xff] %vm1986, %v1941
      %2007 = vst.msk [vmem:[%s282 + $0xa0] sm:$0xff] %vm1986, %v1942
      %2008 = vst.msk [vmem:[%s282 + $0xa8] sm:$0xff] %vm1986, %v1943
      %2009 = vst.msk [vmem:[%s282 + $0xb0] sm:$0xff] %vm1986, %v1944
      %2010 = vst.msk [vmem:[%s282 + $0xb8] sm:$0xff] %vm1986, %v1945
      %2011 = vst.msk [vmem:[%s282 + $0xc0] sm:$0xff] %vm1986, %v1946
      %2012 = vst.msk [vmem:[%s282 + $0xc8] sm:$0xff] %vm1986, %v1947
      %2013 = vst.msk [vmem:[%s282 + $0xd0] sm:$0xff] %vm1986, %v1948
      %2014 = vst.msk [vmem:[%s282 + $0xd8] sm:$0xff] %vm1986, %v1949
      %2015 = vst.msk [vmem:[%s282 + $0xe0] sm:$0xff] %vm1986, %v1950
      %2016 = vst.msk [vmem:[%s282 + $0xe8] sm:$0xff] %vm1986, %v1951
      %2017 = vst.msk [vmem:[%s282 + $0xf0] sm:$0xff] %vm1986, %v1952
      %2018 = vst.msk [vmem:[%s282 + $0xf8] sm:$0xff] %vm1986, %v1953
      %2019 = vst.msk [vmem:[%s282 + $0x100] sm:$0xff] %vm1986, %v1954
      %2020 = vst.msk [vmem:[%s282 + $0x108] sm:$0xff] %vm1986, %v1955
      %2021 = vst.msk [vmem:[%s282 + $0x110] sm:$0xff] %vm1986, %v1956
      %2022 = vst.msk [vmem:[%s282 + $0x118] sm:$0xff] %vm1986, %v1957
      %2023 = vst.msk [vmem:[%s282 + $0x120] sm:$0xff] %vm1986, %v1958
      %2024 = vst.msk [vmem:[%s282 + $0x128] sm:$0xff] %vm1986, %v1959
      %2025 = vst.msk [vmem:[%s282 + $0x130] sm:$0xff] %vm1986, %v1960
      %2026 = vst.msk [vmem:[%s282 + $0x138] sm:$0xff] %vm1986, %v1961
      %2027 = vst.msk [vmem:[%s282 + $0x140] sm:$0xff] %vm1986, %v1962
      %2028 = vst.msk [vmem:[%s282 + $0x148] sm:$0xff] %vm1986, %v1963
      %2029 = vst.msk [vmem:[%s282 + $0x150] sm:$0xff] %vm1986, %v1964
      %2030 = vst.msk [vmem:[%s282 + $0x158] sm:$0xff] %vm1986, %v1965
      %2031 = vst.msk [vmem:[%s282 + $0x160] sm:$0xff] %vm1986, %v1966
      %2032 = vst.msk [vmem:[%s282 + $0x168] sm:$0xff] %vm1986, %v1967
      %2033 = vst.msk [vmem:[%s282 + $0x170] sm:$0xff] %vm1986, %v1968
      %2034 = vst.msk [vmem:[%s282 + $0x178] sm:$0xff] %vm1986, %v1969
      %2035 = vst.msk [vmem:[%s282 + $0x180] sm:$0xff] %vm1986, %v1970
      %2036 = vst.msk [vmem:[%s282 + $0x188] sm:$0xff] %vm1986, %v1971
      %2037 = vst.msk [vmem:[%s282 + $0x190] sm:$0xff] %vm1986, %v1972
      %2038 = vst.msk [vmem:[%s282 + $0x198] sm:$0xff] %vm1986, %v1973
      %2039 = vst.msk [vmem:[%s282 + $0x1a0] sm:$0xff] %vm1986, %v1974
      %2040 = vst.msk [vmem:[%s282 + $0x1a8] sm:$0xff] %vm1986, %v1975
      %2041 = vst.msk [vmem:[%s282 + $0x1b0] sm:$0xff] %vm1986, %v1976
      %2042 = vst.msk [vmem:[%s282 + $0x1b8] sm:$0xff] %vm1986, %v1977
      %2043 = vst.msk [vmem:[%s282 + $0x1c0] sm:$0xff] %vm1986, %v1978
      %2044 = vst.msk [vmem:[%s282 + $0x1c8] sm:$0xff] %vm1986, %v1979
      %2045 = vst.msk [vmem:[%s282 + $0x1d0] sm:$0xff] %vm1986, %v1980
      %2046 = vst.msk [vmem:[%s282 + $0x1d8] sm:$0xff] %vm1986, %v1981
      %2047 = vst.msk [vmem:[%s282 + $0x1e0] sm:$0xff] %vm1986, %v1982
      %2048 = vst.msk [vmem:[%s282 + $0x1e8] sm:$0xff] %vm1986, %v1983
      %2049 = vst.msk [vmem:[%s282 + $0x1f0] sm:$0xff] %vm1986, %v1984
      %2050 = vst.msk [vmem:[%s282 + $0x1f8] sm:$0xff] %vm1986, %v1985
      %s2051 = smul.u32 64, %s20
      %p2052 = scmp.lt.s32.totalorder %s2051, 127
      %s2053 = scalar_select %p2052, %s2051, 127
      %s2054 = smul.addr %s2053, 8
      %s2055 = scalar_lea.vmem %s7, %s2054
      // Predicated region
      $region49: #{mlp_forward.1} parent=47 // pred_check
        %p2056 = pneg %p190
      $region50: #{mlp_forward.1} parent=47 // pred_check_branch
        %2058 = sbr.rel (%p2056) target = $region52
      $region51: #{mlp_forward.1} parent=47 // pred_region
        %s2059 = smul.u32 64, %s20
      $region52: #{mlp_forward.1} parent=47 // pred_fallthru
        _
    $region48: #{mlp_forward.1} parent=5 // pred_fallthru
      _
    %p2060 = scmp.le.s32.totalorder 2, %s15
    // Predicated region
    $region53: #{mlp_forward.1} parent=5 // pred_check
      %p2061 = pneg %p2060
    $region54: #{mlp_forward.1} parent=5 // pred_check_branch
      %2063 = sbr.rel (%p2061) target = $region56
    $region55: #{mlp_forward.1} parent=5 // pred_region
      %s2064 = ssub.s32 %s15, 2
      // Predicated region
      $region57: #{mlp_forward.1} parent=55 // pred_check
        %p2065 = pneg %p196
      $region58: #{mlp_forward.1} parent=55 // pred_check_branch
        %2067 = sbr.rel (%p2065) target = $region60
      $region59: #{mlp_forward.1} parent=55 // pred_region
        %s2068 = smul.u32 64, %s21
        %p2069 = scmp.lt.s32.totalorder %s2068, 127
        %s2070 = scalar_select %p2069, %s2068, 127
        %s2071 = smul.addr %s2070, 8
        %s2072 = scalar_lea.vmem %s7, %s2071
      $region60: #{mlp_forward.1} parent=55 // pred_fallthru
        _
    $region56: #{mlp_forward.1} parent=5 // pred_fallthru
      _
  $region6: #{mlp_forward.1} parent=0 // loop_footer
    %s19 = sadd.s32 1, %s15
  $region7: #{mlp_forward.1} parent=0 // loop_footer_branch
    %14 = sbr.rel target = $region3
  $region8: #{mlp_forward.1} parent=0 // loop_exit
    _

</llo_original>
